<compile_context>
chip_gen: v6e
topology: v6e:2x2x1
jax: 0.10.0
libtpu: 0.0.40
codegen_flags: <defaults>
</compile_context>

<pallas_src>
import jax
import jax.numpy as jnp
from jax.experimental import pallas as pl
from jax.experimental.pallas import tpu as pltpu

BN_EPS = 1e-5


def _round_up(x, m):
    return ((x + m - 1) // m) * m


def regmodel_kernel(x_ref, w1_ref, b1_ref, w2_ref, b2_ref, w3_ref, b3_ref, o_ref):
    # Hoist bias loads once per batch tile.
    b1 = b1_ref[...]            # (1, h1) f32
    b2 = b2_ref[...]            # (1, h2) f32

    # Layer 1: Linear + ReLU  (BN1 already folded into w2/b2; dropout = id).
    h1 = jnp.dot(x_ref[...], w1_ref[...], preferred_element_type=jnp.float32)
    h1 = jnp.maximum(h1 + b1, 0.0)

    # Layer 2: Linear + ReLU  (BN2 already folded into w3/b3; dropout = id).
    h2 = jnp.dot(h1.astype(jnp.bfloat16), w2_ref[...],
                 preferred_element_type=jnp.float32)
    h2 = jnp.maximum(h2 + b2, 0.0)

    # Output head (h2 -> 1) off the MXU: VPU multiply + XLU lane reduce.
    w3v = w3_ref[...]                                    # (1, h2) f32
    head = jnp.sum(h2 * w3v, axis=-1, keepdims=True)     # (tile_b, 1) f32
    o_ref[...] = head + b3_ref[...]                      # + (1, 1) scalar bias


def prep_params(p, weight_dtype=jnp.bfloat16):
    """Fold eval-mode BatchNorms into the following Linears; head weights as a
    f32 row vector (no 128-lane padding anymore)."""
    # BN1 folded into (w2, b2):  bn1(r) = r*scale1 + shift1
    scale1 = p["g1"] * jax.lax.rsqrt(p["v1"] + BN_EPS)            # (1, h1)
    shift1 = p["be1"] - p["m1"] * scale1                          # (1, h1)
    w2f = p["w2"] * scale1.reshape(-1, 1)                         # (h1, h2)
    b2f = p["b2"] + shift1 @ p["w2"]                              # (1, h2)

    # BN2 folded into (w3, b3).
    scale2 = p["g2"] * jax.lax.rsqrt(p["v2"] + BN_EPS)            # (1, h2)
    shift2 = p["be2"] - p["m2"] * scale2                          # (1, h2)
    w3f = p["w3"] * scale2.reshape(-1, 1)                         # (h2, 1)
    b3f = p["b3"] + shift2 @ p["w3"]                              # (1, 1)

    return dict(
        w1=p["w1"].astype(weight_dtype), b1=p["b1"].astype(jnp.float32),
        w2=w2f.astype(weight_dtype),     b2=b2f.astype(jnp.float32),
        # Head stays f32 (tiny) and is stored as a (1, h2) row vector.
        w3=w3f.reshape(1, -1).astype(jnp.float32),
        b3=b3f.astype(jnp.float32),
    )


def _choose_tile(b_pad, tile_b_max):
    """Pick a batch tile: big enough to amortize per-step overhead, split in
    two for small batches so a 2-TC part (v7x) can shard the grid."""
    tile_b_max = max(128, _round_up(tile_b_max, 128))
    if b_pad > tile_b_max:
        return tile_b_max                       # >= 2 grid steps automatically
    if b_pad >= 512:
        return _round_up(pl.cdiv(b_pad, 2), 128)  # 2 grid steps for megacore
    return b_pad                                # single full-batch tile


def regmodel_forward(x, q, tile_b=1024):
    """x: (B, inp_size) f32.  q: prep_params(...) output.  Returns (B, 1) f32."""
    B, inp = x.shape
    h1 = q["w1"].shape[1]
    h2 = q["w2"].shape[1]

    # Cast activations once in the wrapper; pad batch only to a multiple of 16
    # (bf16 sublane packing), never to a multiple of tile_b.
    x = x.astype(jnp.bfloat16)
    b_pad = _round_up(B, 16)
    if b_pad != B:
        x = jnp.pad(x, ((0, b_pad - B), (0, 0)))

    tile_b = _choose_tile(b_pad, tile_b)
    grid = (pl.cdiv(b_pad, tile_b),)            # partial last block is fine

    out = pl.pallas_call(
        regmodel_kernel,
        out_shape=jax.ShapeDtypeStruct((b_pad, 1), jnp.float32),
        grid=grid,
        in_specs=[
            pl.BlockSpec((tile_b, inp), lambda i: (i, 0)),   # x: batch-tiled bf16
            pl.BlockSpec((inp, h1),     lambda i: (0, 0)),   # weights/biases
            pl.BlockSpec((1, h1),       lambda i: (0, 0)),   #   stay resident
            pl.BlockSpec((h1, h2),      lambda i: (0, 0)),   #   across batch
            pl.BlockSpec((1, h2),       lambda i: (0, 0)),   #   tiles
            pl.BlockSpec((1, h2),       lambda i: (0, 0)),   # w3 row vector f32
            pl.BlockSpec((1, 1),        lambda i: (0, 0)),   # b3 scalar
        ],
        out_specs=pl.BlockSpec((tile_b, 1), lambda i: (i, 0)),
        compiler_params=pltpu.CompilerParams(
            dimension_semantics=("parallel",)),
    )(x, q["w1"], q["b1"], q["w2"], q["b2"], q["w3"], q["b3"])

    return out[:B]


def init_params(key, inp_size, h1_size=512, h2_size=1024):
    """Deterministic synthetic parameters (PyTorch-style uniform fan-in init)."""
    ks = jax.random.split(key, 8)

    def lin(kw, kb, fan_in, fan_out):
        bound = 1.0 / jnp.sqrt(jnp.float32(fan_in))
        w = jax.random.uniform(kw, (fan_in, fan_out), jnp.float32, -bound, bound)
        b = jax.random.uniform(kb, (1, fan_out), jnp.float32, -bound, bound)
        return w, b

    w1, b1 = lin(ks[0], ks[1], inp_size, h1_size)
    w2, b2 = lin(ks[2], ks[3], h1_size, h2_size)
    w3, b3 = lin(ks[4], ks[5], h2_size, 1)

    g1 = 1.0 + 0.1 * jax.random.normal(ks[6], (1, h1_size), jnp.float32)
    be1 = 0.05 * jnp.ones((1, h1_size), jnp.float32)
    m1 = 0.01 * jnp.arange(h1_size, dtype=jnp.float32).reshape(1, h1_size) / h1_size
    v1 = 1.0 + 0.02 * jnp.ones((1, h1_size), jnp.float32)

    g2 = 1.0 + 0.1 * jax.random.normal(ks[7], (1, h2_size), jnp.float32)
    be2 = -0.05 * jnp.ones((1, h2_size), jnp.float32)
    m2 = 0.01 * jnp.arange(h2_size, dtype=jnp.float32).reshape(1, h2_size) / h2_size
    v2 = 1.0 + 0.03 * jnp.ones((1, h2_size), jnp.float32)

    return dict(
        w1=w1, b1=b1, g1=g1, be1=be1, m1=m1, v1=v1,
        w2=w2, b2=b2, g2=g2, be2=be2, m2=m2, v2=v2,
        w3=w3, b3=b3,
    )


def regmodel_ref(x, p):
    """Pure-JAX f32 reference of the original (unfolded) eval-mode forward."""
    h1 = jnp.maximum(x @ p["w1"] + p["b1"], 0.0)
    h1 = (h1 - p["m1"]) / jnp.sqrt(p["v1"] + BN_EPS) * p["g1"] + p["be1"]
    h2 = jnp.maximum(h1 @ p["w2"] + p["b2"], 0.0)
    h2 = (h2 - p["m2"]) / jnp.sqrt(p["v2"] + BN_EPS) * p["g2"] + p["be2"]
    return h2 @ p["w3"] + p["b3"]


def regmodel_prepped_ref(x, q):
    """Same-precision (bf16 weights/activations, f32 accumulate, f32 VPU head)
    reference of the exact kernel math."""
    xb = x.astype(jnp.bfloat16)
    h1 = jnp.maximum(
        jnp.dot(xb, q["w1"], preferred_element_type=jnp.float32) + q["b1"], 0.0)
    h2 = jnp.maximum(
        jnp.dot(h1.astype(jnp.bfloat16), q["w2"],
                preferred_element_type=jnp.float32) + q["b2"], 0.0)
    return jnp.sum(h2 * q["w3"], axis=-1, keepdims=True) + q["b3"]


if __name__ == "__main__":
    key = jax.random.PRNGKey(0)
    k_x, k_p = jax.random.split(key)

    B, INP = 8, 32
    x = jax.random.normal(k_x, (B, INP), jnp.float32)
    params = init_params(k_p, INP, h1_size=512, h2_size=1024)
    prepped = prep_params(params)

    out = regmodel_forward(x, prepped)
    out = jax.block_until_ready(out)
    assert out.shape == (B, 1), out.shape

    # Tight check: kernel vs. same-precision JAX math (tests the kernel itself).
    ref_p = regmodel_prepped_ref(x, prepped)
    assert jnp.allclose(out, ref_p, atol=1e-3, rtol=1e-3), (
        "mismatch vs prepped reference", float(jnp.max(jnp.abs(out - ref_p))))

    # Loose check: kernel vs. original f32 eval-mode semantics (bf16 weights
    # introduce ~1e-3-level error, so tolerance is loosened only here).
    ref = regmodel_ref(x, params)
    assert jnp.allclose(out, ref, atol=5e-2, rtol=5e-2), (
        "mismatch vs f32 reference", float(jnp.max(jnp.abs(out - ref))))

    print("KERNEL_OK")
</pallas_src>

<mosaic_0001>
module attributes {stable_mosaic.version = 11 : i64} {
  func.func @regmodel_kernel(%arg0: i32, %arg1: memref<16x32xbf16, #tpu.memory_space<vmem>>, %arg2: memref<32x512xbf16, #tpu.memory_space<vmem>>, %arg3: memref<1x512xf32, #tpu.memory_space<vmem>>, %arg4: memref<512x1024xbf16, #tpu.memory_space<vmem>>, %arg5: memref<1x1024xf32, #tpu.memory_space<vmem>>, %arg6: memref<1x1024xf32, #tpu.memory_space<vmem>>, %arg7: memref<1x1xf32, #tpu.memory_space<vmem>>, %arg8: memref<16x1xf32, #tpu.memory_space<vmem>>) attributes {dimension_semantics = [#tpu.dimension_semantics<parallel>], iteration_bounds = array<i64: 1>, scalar_prefetch = 0 : i64, scratch_operands = 0 : i64, tpu.core_type = #tpu.core_type<tc>, window_params = [{transform_indices = @transform_0, window_bounds = array<i64: 16, 32>}, {pipeline_mode = #tpu.pipeline_mode<synchronous>, transform_indices = @transform_1, window_bounds = array<i64: 32, 512>}, {pipeline_mode = #tpu.pipeline_mode<synchronous>, transform_indices = @transform_2, window_bounds = array<i64: 1, 512>}, {pipeline_mode = #tpu.pipeline_mode<synchronous>, transform_indices = @transform_3, window_bounds = array<i64: 512, 1024>}, {pipeline_mode = #tpu.pipeline_mode<synchronous>, transform_indices = @transform_4, window_bounds = array<i64: 1, 1024>}, {pipeline_mode = #tpu.pipeline_mode<synchronous>, transform_indices = @transform_5, window_bounds = array<i64: 1, 1024>}, {pipeline_mode = #tpu.pipeline_mode<synchronous>, transform_indices = @transform_6, window_bounds = array<i64: 1, 1>}, {transform_indices = @transform_7, window_bounds = array<i64: 16, 1>}]} {
    %c0 = arith.constant 0 : index
    %c0_0 = arith.constant 0 : index
    %0 = vector.load %arg3[%c0, %c0_0] : memref<1x512xf32, #tpu.memory_space<vmem>>, vector<1x512xf32>
    %c0_1 = arith.constant 0 : index
    %c0_2 = arith.constant 0 : index
    %1 = vector.load %arg5[%c0_1, %c0_2] : memref<1x1024xf32, #tpu.memory_space<vmem>>, vector<1x1024xf32>
    %c0_3 = arith.constant 0 : index
    %c0_4 = arith.constant 0 : index
    %2 = vector.load %arg1[%c0_3, %c0_4] : memref<16x32xbf16, #tpu.memory_space<vmem>>, vector<16x32xbf16>
    %c0_5 = arith.constant 0 : index
    %c0_6 = arith.constant 0 : index
    %3 = vector.load %arg2[%c0_5, %c0_6] : memref<32x512xbf16, #tpu.memory_space<vmem>>, vector<32x512xbf16>
    %cst = arith.constant dense<0.000000e+00> : vector<16x512xf32>
    %4 = tpu.matmul %2, %3, %cst {dimension_numbers = #tpu.dot_dimension_numbers<[1], [0], [0], [1], [0, 0, 1, 1], [], []>} : vector<16x32xbf16>, vector<32x512xbf16>, vector<16x512xf32> -> vector<16x512xf32>
    %5 = vector.broadcast %0 : vector<1x512xf32> to vector<16x512xf32>
    %6 = arith.addf %4, %5 : vector<16x512xf32>
    %cst_7 = arith.constant 0.000000e+00 : f32
    %7 = vector.broadcast %cst_7 : f32 to vector<16x512xf32>
    %8 = arith.maximumf %6, %7 : vector<16x512xf32>
    %9 = arith.truncf %8 : vector<16x512xf32> to vector<16x512xbf16>
    %c0_8 = arith.constant 0 : index
    %c0_9 = arith.constant 0 : index
    %10 = vector.load %arg4[%c0_8, %c0_9] : memref<512x1024xbf16, #tpu.memory_space<vmem>>, vector<512x1024xbf16>
    %cst_10 = arith.constant dense<0.000000e+00> : vector<16x1024xf32>
    %11 = tpu.matmul %9, %10, %cst_10 {dimension_numbers = #tpu.dot_dimension_numbers<[1], [0], [0], [1], [0, 0, 1, 1], [], []>} : vector<16x512xbf16>, vector<512x1024xbf16>, vector<16x1024xf32> -> vector<16x1024xf32>
    %12 = vector.broadcast %1 : vector<1x1024xf32> to vector<16x1024xf32>
    %13 = arith.addf %11, %12 : vector<16x1024xf32>
    %cst_11 = arith.constant 0.000000e+00 : f32
    %14 = vector.broadcast %cst_11 : f32 to vector<16x1024xf32>
    %15 = arith.maximumf %13, %14 : vector<16x1024xf32>
    %c0_12 = arith.constant 0 : index
    %c0_13 = arith.constant 0 : index
    %16 = vector.load %arg6[%c0_12, %c0_13] : memref<1x1024xf32, #tpu.memory_space<vmem>>, vector<1x1024xf32>
    %17 = vector.broadcast %16 : vector<1x1024xf32> to vector<16x1024xf32>
    %18 = arith.mulf %15, %17 : vector<16x1024xf32>
    %cst_14 = arith.constant dense<0.000000e+00> : vector<16xf32>
    %19 = vector.multi_reduction <add>, %18, %cst_14 [1] : vector<16x1024xf32> to vector<16xf32>
    %20 = vector.shape_cast %19 : vector<16xf32> to vector<16x1xf32>
    %c0_15 = arith.constant 0 : index
    %c0_16 = arith.constant 0 : index
    %21 = vector.load %arg7[%c0_15, %c0_16] : memref<1x1xf32, #tpu.memory_space<vmem>>, vector<1x1xf32>
    %22 = vector.broadcast %21 : vector<1x1xf32> to vector<16x1xf32>
    %23 = arith.addf %20, %22 : vector<16x1xf32>
    %c0_17 = arith.constant 0 : index
    %c0_18 = arith.constant 0 : index
    %24 = vector.load %arg8[%c0_17, %c0_18] : memref<16x1xf32, #tpu.memory_space<vmem>>, vector<16x1xf32>
    tpu.vector_store %arg8[%c0_17, %c0_18], %23 {strides = array<i32>} : memref<16x1xf32, #tpu.memory_space<vmem>>, vector<16x1xf32>,
    return
  }
  func.func @transform_0(%arg0: i32) -> (i32, i32) {
    %c0_i32 = arith.constant 0 : i32
    %c0_i32_0 = arith.constant 0 : i32
    return %arg0, %c0_i32 : i32, i32
  }
  func.func @transform_1(%arg0: i32) -> (i32, i32) {
    %c0_i32 = arith.constant 0 : i32
    %c0_i32_0 = arith.constant 0 : i32
    %c0_i32_1 = arith.constant 0 : i32
    return %c0_i32, %c0_i32_0 : i32, i32
  }
  func.func @transform_2(%arg0: i32) -> (i32, i32) {
    %c0_i32 = arith.constant 0 : i32
    %c0_i32_0 = arith.constant 0 : i32
    %c0_i32_1 = arith.constant 0 : i32
    return %c0_i32, %c0_i32_0 : i32, i32
  }
  func.func @transform_3(%arg0: i32) -> (i32, i32) {
    %c0_i32 = arith.constant 0 : i32
    %c0_i32_0 = arith.constant 0 : i32
    %c0_i32_1 = arith.constant 0 : i32
    return %c0_i32, %c0_i32_0 : i32, i32
  }
  func.func @transform_4(%arg0: i32) -> (i32, i32) {
    %c0_i32 = arith.constant 0 : i32
    %c0_i32_0 = arith.constant 0 : i32
    %c0_i32_1 = arith.constant 0 : i32
    return %c0_i32, %c0_i32_0 : i32, i32
  }
  func.func @transform_5(%arg0: i32) -> (i32, i32) {
    %c0_i32 = arith.constant 0 : i32
    %c0_i32_0 = arith.constant 0 : i32
    %c0_i32_1 = arith.constant 0 : i32
    return %c0_i32, %c0_i32_0 : i32, i32
  }
  func.func @transform_6(%arg0: i32) -> (i32, i32) {
    %c0_i32 = arith.constant 0 : i32
    %c0_i32_0 = arith.constant 0 : i32
    %c0_i32_1 = arith.constant 0 : i32
    return %c0_i32, %c0_i32_0 : i32, i32
  }
  func.func @transform_7(%arg0: i32) -> (i32, i32) {
    %c0_i32 = arith.constant 0 : i32
    %c0_i32_0 = arith.constant 0 : i32
    return %arg0, %c0_i32 : i32, i32
  }
}

</mosaic_0001>

<llo_original>
// kernel: tpu_custom_call.1
$region0: #{tpu_custom_call.1}
  #allocation0 [shape = 'u32[]', space=smem, size = 0x4, offset = 0x4, fixed_abs, tag = 'smem constant byte address 0x4 - core index']
  #allocation1 [shape = 'u32[144,128]{1,0:T(1,128)}', space=vmem, size = 0x12000, scoped, tag = 'internal scratch']
  #allocation2 [shape = 'f32[1,1]{1,0:T(1,128)S(1)}', space=vmem, size = 0x200, scoped, tag = 'scoped memory for tpu_custom_call.1']
  %s0 = inlined_call_operand.hbm [shape: bf16[16,32], index: 0, kind: input, shape index: {}]
  %s1 = inlined_call_operand.hbm [shape: bf16[32,512], index: 1, kind: input, shape index: {}]
  %s2 = inlined_call_operand.hbm [shape: f32[1,512], index: 2, kind: input, shape index: {}]
  %s3 = inlined_call_operand.hbm [shape: bf16[512,1024], index: 3, kind: input, shape index: {}]
  %s4 = inlined_call_operand.vmem [shape: f32[1,1024], index: 4, kind: input, shape index: {}]
  %s5 = inlined_call_operand.hbm [shape: f32[1,1024], index: 5, kind: input, shape index: {}]
  %s6 = inlined_call_operand.<no memory space> [shape: f32[1,1], index: 6, kind: input, shape index: {}]
  %s7 = inlined_call_operand.vmem [shape: f32[16,1], index: 7, kind: output, shape index: {}]
  %s8 = sld [smem:[#allocation0]]
  $region58: #{tpu_custom_call.1} parent=0
    _
  %s10 = ssub.s32 1, %s8
  %s11 = scalar_select 0, %s10, %s8
  %v12 = vstv %s6
  %13 = vst [vmem:[#allocation2] sm:$0x1] %v12
  $region1: #{tpu_custom_call.1} parent=0
    #allocation3 [shape = 'u8[4096]{0}', space=vmem, size = 0x1000, scoped, tag = 'input window, operand 0, single buffered']
    #allocation4 [shape = 's32[1]{0}', space=sflag, size = 0x4, scoped, tag = 'scoped memory for tpu_custom_call.1']
    #allocation5 [shape = 'u8[32768]{0}', space=vmem, size = 0x8000, scoped, tag = 'input window, operand 1, single buffered']
    #allocation6 [shape = 's32[1]{0}', space=sflag, size = 0x4, scoped, tag = 'scoped memory for tpu_custom_call.1']
    #allocation7 [shape = 'u8[2048]{0}', space=vmem, size = 0x800, scoped, tag = 'input window, operand 2, single buffered']
    #allocation8 [shape = 'u8[1048576]{0}', space=vmem, size = 0x100000, scoped, tag = 'input window, operand 3, single buffered']
    #allocation9 [shape = 's32[1]{0}', space=sflag, size = 0x4, scoped, tag = 'scoped memory for tpu_custom_call.1']
    #allocation10 [shape = 'u8[4096]{0}', space=vmem, size = 0x1000, scoped, tag = 'input window, operand 5, single buffered']
    %14 = vsyncpa [#allocation4], 0
    %15 = vsyncpa [#allocation6], 0
    %16 = vsyncpa [#allocation9], 0
    // Predicated region
    $region2: #{tpu_custom_call.1} parent=1 // pred_check
      _
    $region3: #{tpu_custom_call.1} parent=1 // pred_check_branch
      %18 = sbr.rel (0) target = $region5
    $region4: #{tpu_custom_call.1} parent=1 // pred_region
      %s20 = ssub.s32 128, 128
      %21 = vsyncadd [#allocation4], %s20
      %s22 = sshll.u32 [#allocation3], 4
      %s23 = int_to_ptr.vmem [resolvable:$true] %s22
      %28 = dma.hbm_to_vmem [thread:$0]  %s0, 128, %s23, [#allocation4], 64, 64, 4
    $region5: #{tpu_custom_call.1} parent=1 // pred_fallthru
      _
    // Predicated region
    $region6: #{tpu_custom_call.1} parent=1 // pred_check
      _
    $region7: #{tpu_custom_call.1} parent=1 // pred_check_branch
      %30 = sbr.rel (0) target = $region9
    $region8: #{tpu_custom_call.1} parent=1 // pred_region
      %s32 = ssub.s32 1024, 1024
      %33 = vsyncadd [#allocation6], %s32
      %s34 = sshll.u32 [#allocation5], 4
      %s35 = int_to_ptr.vmem [resolvable:$true] %s34
      %40 = dma.hbm_to_vmem [thread:$0]  %s1, 1024, %s35, [#allocation6], 256, 256, 16
    $region9: #{tpu_custom_call.1} parent=1 // pred_fallthru
      _
    // Predicated region
    $region10: #{tpu_custom_call.1} parent=1 // pred_check
      _
    $region11: #{tpu_custom_call.1} parent=1 // pred_check_branch
      %42 = sbr.rel (0) target = $region13
    $region12: #{tpu_custom_call.1} parent=1 // pred_region
      %s44 = ssub.s32 64, 64
      %45 = vsyncadd [#allocation6], %s44
      %s47 = sshll.u32 [#allocation7], 4
      %s48 = int_to_ptr.vmem [resolvable:$true] %s47
      %50 = dma.hbm_to_vmem [thread:$0]  %s2, 64, %s48, [#allocation6]
    $region13: #{tpu_custom_call.1} parent=1 // pred_fallthru
      _
    // Predicated region
    $region14: #{tpu_custom_call.1} parent=1 // pred_check
      _
    $region15: #{tpu_custom_call.1} parent=1 // pred_check_branch
      %52 = sbr.rel (0) target = $region17
    $region16: #{tpu_custom_call.1} parent=1 // pred_region
      %s54 = ssub.s32 32768, 32768
      %55 = vsyncadd [#allocation9], %s54
      %s56 = sshll.u32 [#allocation8], 4
      %s57 = int_to_ptr.vmem [resolvable:$true] %s56
      %62 = dma.hbm_to_vmem [thread:$0]  %s3, 32768, %s57, [#allocation9], 512, 512, 32
    $region17: #{tpu_custom_call.1} parent=1 // pred_fallthru
      _
    // Predicated region
    $region18: #{tpu_custom_call.1} parent=1 // pred_check
      _
    $region19: #{tpu_custom_call.1} parent=1 // pred_check_branch
      %64 = sbr.rel (0) target = $region21
    $region20: #{tpu_custom_call.1} parent=1 // pred_region
      _
    $region21: #{tpu_custom_call.1} parent=1 // pred_fallthru
      _
    // Predicated region
    $region22: #{tpu_custom_call.1} parent=1 // pred_check
      _
    $region23: #{tpu_custom_call.1} parent=1 // pred_check_branch
      %66 = sbr.rel (0) target = $region25
    $region24: #{tpu_custom_call.1} parent=1 // pred_region
      %s68 = ssub.s32 128, 128
      %69 = vsyncadd [#allocation9], %s68
      %s71 = sshll.u32 [#allocation10], 4
      %s72 = int_to_ptr.vmem [resolvable:$true] %s71
      %74 = dma.hbm_to_vmem [thread:$0]  %s5, 128, %s72, [#allocation9]
    $region25: #{tpu_custom_call.1} parent=1 // pred_fallthru
      _
    // Predicated region
    $region26: #{tpu_custom_call.1} parent=1 // pred_check
      _
    $region27: #{tpu_custom_call.1} parent=1 // pred_check_branch
      %76 = sbr.rel (0) target = $region29
    $region28: #{tpu_custom_call.1} parent=1 // pred_region
      _
    $region29: #{tpu_custom_call.1} parent=1 // pred_fallthru
      _
    // Predicated region
    $region30: #{tpu_custom_call.1} parent=1 // pred_check
      _
    $region31: #{tpu_custom_call.1} parent=1 // pred_check_branch
      %78 = sbr.rel (0) target = $region33
    $region32: #{tpu_custom_call.1} parent=1 // pred_region
      %79 = dma.done [#allocation4], 128
    $region33: #{tpu_custom_call.1} parent=1 // pred_fallthru
      _
    // Predicated region
    $region34: #{tpu_custom_call.1} parent=1 // pred_check
      _
    $region35: #{tpu_custom_call.1} parent=1 // pred_check_branch
      %81 = sbr.rel (0) target = $region37
    $region36: #{tpu_custom_call.1} parent=1 // pred_region
      %82 = dma.done [#allocation6], 1024
    $region37: #{tpu_custom_call.1} parent=1 // pred_fallthru
      _
    // Predicated region
    $region38: #{tpu_custom_call.1} parent=1 // pred_check
      _
    $region39: #{tpu_custom_call.1} parent=1 // pred_check_branch
      %84 = sbr.rel (0) target = $region41
    $region40: #{tpu_custom_call.1} parent=1 // pred_region
      %85 = dma.done [#allocation6], 64
    $region41: #{tpu_custom_call.1} parent=1 // pred_fallthru
      _
    // Predicated region
    $region42: #{tpu_custom_call.1} parent=1 // pred_check
      _
    $region43: #{tpu_custom_call.1} parent=1 // pred_check_branch
      %87 = sbr.rel (0) target = $region45
    $region44: #{tpu_custom_call.1} parent=1 // pred_region
      %88 = dma.done [#allocation9], 32768
    $region45: #{tpu_custom_call.1} parent=1 // pred_fallthru
      _
    // Predicated region
    $region46: #{tpu_custom_call.1} parent=1 // pred_check
      _
    $region47: #{tpu_custom_call.1} parent=1 // pred_check_branch
      %90 = sbr.rel (0) target = $region49
    $region48: #{tpu_custom_call.1} parent=1 // pred_region
      %91 = dma.done [#allocation9], 128
    $region49: #{tpu_custom_call.1} parent=1 // pred_fallthru
      _
    %v93 = vld [vmem:[#allocation7] sm:$0xf]
    %v94 = vld [vmem:[%s4] sm:$0xff]
    %v95 = vld [vmem:[#allocation3] sm:$0xf]
    %v96 = vld [vmem:[#allocation3 + $0x4] sm:$0xf]
    %v97 = vld [vmem:[#allocation5] sm:$0xff]
    %v98 = vld [vmem:[#allocation5 + $0x8] sm:$0xff]
    %v99 = vld [vmem:[#allocation5 + $0x10] sm:$0xff]
    %v100 = vld [vmem:[#allocation5 + $0x18] sm:$0xff]
    %v101 = vld [vmem:[#allocation5 + $0x20] sm:$0xff]
    %v102 = vld [vmem:[#allocation5 + $0x28] sm:$0xff]
    %v103 = vld [vmem:[#allocation5 + $0x30] sm:$0xff]
    %v104 = vld [vmem:[#allocation5 + $0x38] sm:$0xff]
    %v106 = vlaneseq
    %v107 = vshrl.u32 %v106, 7
    %v108 = vsub.s32 0, %v107
    %v109 = vrot.slane %v93, %v108
    %v110 = vlaneseq
    %v111 = vshrl.u32 %v110, 7
    %v112 = vsub.s32 1, %v111
    %v113 = vrot.slane %v93, %v112
    %v114 = vlaneseq
    %v115 = vshrl.u32 %v114, 7
    %v116 = vsub.s32 2, %v115
    %v117 = vrot.slane %v93, %v116
    %v118 = vlaneseq
    %v119 = vshrl.u32 %v118, 7
    %v120 = vsub.s32 3, %v119
    %v121 = vrot.slane %v93, %v120
    %v128 = vunpack.c.l.b16 %v95
    %v129 = vunpack.c.l.b16 %v96
    %v130 = vpack.c.b16 %v129, %v128
    %v139 = vunpack.c.l.b16 %v97
    %v140 = vunpack.c.h.b16 %v97
    %v141 = vunpack.c.l.b16 %v98
    %v142 = vunpack.c.h.b16 %v98
    %v143 = vunpack.c.l.b16 %v99
    %v144 = vunpack.c.h.b16 %v99
    %v145 = vunpack.c.l.b16 %v100
    %v146 = vunpack.c.h.b16 %v100
    %v147 = vunpack.c.l.b16 %v101
    %v148 = vunpack.c.h.b16 %v101
    %v149 = vunpack.c.l.b16 %v102
    %v150 = vunpack.c.h.b16 %v102
    %v151 = vunpack.c.l.b16 %v103
    %v152 = vunpack.c.h.b16 %v103
    %v153 = vunpack.c.l.b16 %v104
    %v154 = vunpack.c.h.b16 %v104
    %v155 = vpack.c.b16 %v143, %v139
    %v156 = vpack.c.b16 %v144, %v140
    %v157 = vpack.c.b16 %v145, %v141
    %v158 = vpack.c.b16 %v146, %v142
    %v159 = vpack.c.b16 %v151, %v147
    %v160 = vpack.c.b16 %v152, %v148
    %v161 = vpack.c.b16 %v153, %v149
    %v162 = vpack.c.b16 %v154, %v150
    %vm171 = vcmask 261120
    %v173 = vsel %vm171, %v130, 0
    %175 = vmatprep.subr.bf16.mxu0 0
    %176 = vmatpush1.bf16.msra.mxu0 0
    %177 = vmatprep.subr.bf16.mxu0 0
    %178 = vmatpush1.bf16.msra.mxu0 0
    %179 = vmatprep.subr.bf16.mxu0 0
    %180 = vmatpush1.bf16.msra.mxu0 0
    %181 = vmatprep.subr.bf16.mxu0 0
    %182 = vmatpush1.bf16.msra.mxu0 0
    %183 = vmatprep.subr.bf16.mxu0 0
    %184 = vmatpush1.bf16.msra.mxu0 0
    %185 = vmatprep.subr.bf16.mxu0 0
    %186 = vmatpush1.bf16.msra.mxu0 0
    %187 = vmatprep.subr.bf16.mxu0 %v160
    %188 = vmatpush1.bf16.msra.mxu0 %v159
    %189 = vmatprep.subr.bf16.mxu0 %v156
    %190 = vmatpush1.bf16.msra.mxu0 %v155
    %191 = vmatprep.subr.bf16.mxu0 0
    %192 = vmatpush2.bf16.msra.mxu0 0
    %193 = vmatprep.subr.bf16.mxu0 0
    %194 = vmatpush2.bf16.msra.mxu0 0
    %195 = vmatprep.subr.bf16.mxu0 0
    %196 = vmatpush2.bf16.msra.mxu0 0
    %197 = vmatprep.subr.bf16.mxu0 0
    %198 = vmatpush2.bf16.msra.mxu0 0
    %199 = vmatprep.subr.bf16.mxu0 0
    %200 = vmatpush2.bf16.msra.mxu0 0
    %201 = vmatprep.subr.bf16.mxu0 0
    %202 = vmatpush2.bf16.msra.mxu0 0
    %203 = vmatprep.subr.bf16.mxu0 0
    %204 = vmatpush2.bf16.msra.mxu0 0
    %205 = vmatprep.subr.bf16.mxu0 0
    %206 = vmatpush2.bf16.msra.mxu0 0
    %207 = vmatprep.mubr.bf16.mxu0 0
    %208 = vmatmul.mubr.bf16.gmra.mxu0 %v173
    %v209 = vpop.f32.mrf.mxu0
    %v210 = vadd.f32 %v109, %v209
    %v211 = vpop.f32.mrf.mxu0
    %v212 = vadd.f32 %v113, %v211
    %v213 = vpop.f32.mrf.mxu0
    %v214 = vadd.f32 %v109, %v213
    %v215 = vpop.f32.mrf.mxu0
    %v216 = vadd.f32 %v113, %v215
    %217 = vdwg.mxu0
    %218 = vmatprep.subr.bf16.mxu0 0
    %219 = vmatpush1.bf16.msra.mxu0 0
    %220 = vmatprep.subr.bf16.mxu0 0
    %221 = vmatpush1.bf16.msra.mxu0 0
    %222 = vmatprep.subr.bf16.mxu0 0
    %223 = vmatpush1.bf16.msra.mxu0 0
    %224 = vmatprep.subr.bf16.mxu0 0
    %225 = vmatpush1.bf16.msra.mxu0 0
    %226 = vmatprep.subr.bf16.mxu0 0
    %227 = vmatpush1.bf16.msra.mxu0 0
    %228 = vmatprep.subr.bf16.mxu0 0
    %229 = vmatpush1.bf16.msra.mxu0 0
    %230 = vmatprep.subr.bf16.mxu0 %v162
    %231 = vmatpush1.bf16.msra.mxu0 %v161
    %232 = vmatprep.subr.bf16.mxu0 %v158
    %233 = vmatpush1.bf16.msra.mxu0 %v157
    %234 = vmatprep.subr.bf16.mxu0 0
    %235 = vmatpush2.bf16.msra.mxu0 0
    %236 = vmatprep.subr.bf16.mxu0 0
    %237 = vmatpush2.bf16.msra.mxu0 0
    %238 = vmatprep.subr.bf16.mxu0 0
    %239 = vmatpush2.bf16.msra.mxu0 0
    %240 = vmatprep.subr.bf16.mxu0 0
    %241 = vmatpush2.bf16.msra.mxu0 0
    %242 = vmatprep.subr.bf16.mxu0 0
    %243 = vmatpush2.bf16.msra.mxu0 0
    %244 = vmatprep.subr.bf16.mxu0 0
    %245 = vmatpush2.bf16.msra.mxu0 0
    %246 = vmatprep.subr.bf16.mxu0 0
    %247 = vmatpush2.bf16.msra.mxu0 0
    %248 = vmatprep.subr.bf16.mxu0 0
    %249 = vmatpush2.bf16.msra.mxu0 0
    %250 = vmatprep.mubr.bf16.mxu0 0
    %251 = vmatmul.mubr.bf16.gmra.mxu0 %v173
    %v252 = vpop.f32.mrf.mxu0
    %v253 = vadd.f32 %v117, %v252
    %v254 = vpop.f32.mrf.mxu0
    %v255 = vadd.f32 %v121, %v254
    %v256 = vpop.f32.mrf.mxu0
    %v257 = vadd.f32 %v117, %v256
    %v258 = vpop.f32.mrf.mxu0
    %v259 = vadd.f32 %v121, %v258
    %260 = vdwg.mxu0
    %v261 = vmax.f32 %v210, 0.0
    %v262 = vmax.f32 %v212, 0.0
    %v263 = vmax.f32 %v253, 0.0
    %v264 = vmax.f32 %v255, 0.0
    %v265 = vmax.f32 %v214, 0.0
    %v266 = vmax.f32 %v216, 0.0
    %v267 = vmax.f32 %v257, 0.0
    %v268 = vmax.f32 %v259, 0.0
    %v269 = vpack.c.bf16 %v265, %v261
    %v270 = vpack.c.bf16 %v266, %v262
    %v271 = vpack.c.bf16 %v267, %v263
    %v272 = vpack.c.bf16 %v268, %v264
    %v273 = vld [vmem:[#allocation8] sm:$0xff]
    %v274 = vld [vmem:[#allocation8 + $0x8] sm:$0xff]
    %v275 = vld [vmem:[#allocation8 + $0x10] sm:$0xff]
    %v276 = vld [vmem:[#allocation8 + $0x18] sm:$0xff]
    %v277 = vld [vmem:[#allocation8 + $0x20] sm:$0xff]
    %v278 = vld [vmem:[#allocation8 + $0x28] sm:$0xff]
    %v279 = vld [vmem:[#allocation8 + $0x30] sm:$0xff]
    %v280 = vld [vmem:[#allocation8 + $0x38] sm:$0xff]
    %v281 = vld [vmem:[#allocation8 + $0x40] sm:$0xff]
    %v282 = vld [vmem:[#allocation8 + $0x48] sm:$0xff]
    %v283 = vld [vmem:[#allocation8 + $0x50] sm:$0xff]
    %v284 = vld [vmem:[#allocation8 + $0x58] sm:$0xff]
    %v285 = vld [vmem:[#allocation8 + $0x60] sm:$0xff]
    %v286 = vld [vmem:[#allocation8 + $0x68] sm:$0xff]
    %v287 = vld [vmem:[#allocation8 + $0x70] sm:$0xff]
    %v288 = vld [vmem:[#allocation8 + $0x78] sm:$0xff]
    %v289 = vld [vmem:[#allocation8 + $0x80] sm:$0xff]
    %v290 = vld [vmem:[#allocation8 + $0x88] sm:$0xff]
    %v291 = vld [vmem:[#allocation8 + $0x90] sm:$0xff]
    %v292 = vld [vmem:[#allocation8 + $0x98] sm:$0xff]
    %v293 = vld [vmem:[#allocation8 + $0xa0] sm:$0xff]
    %v294 = vld [vmem:[#allocation8 + $0xa8] sm:$0xff]
    %v295 = vld [vmem:[#allocation8 + $0xb0] sm:$0xff]
    %v296 = vld [vmem:[#allocation8 + $0xb8] sm:$0xff]
    %v297 = vld [vmem:[#allocation8 + $0xc0] sm:$0xff]
    %v298 = vld [vmem:[#allocation8 + $0xc8] sm:$0xff]
    %v299 = vld [vmem:[#allocation8 + $0xd0] sm:$0xff]
    %v300 = vld [vmem:[#allocation8 + $0xd8] sm:$0xff]
    %v301 = vld [vmem:[#allocation8 + $0xe0] sm:$0xff]
    %v302 = vld [vmem:[#allocation8 + $0xe8] sm:$0xff]
    %v303 = vld [vmem:[#allocation8 + $0xf0] sm:$0xff]
    %v304 = vld [vmem:[#allocation8 + $0xf8] sm:$0xff]
    %v305 = vld [vmem:[#allocation8 + $0x100] sm:$0xff]
    %v306 = vld [vmem:[#allocation8 + $0x108] sm:$0xff]
    %v307 = vld [vmem:[#allocation8 + $0x110] sm:$0xff]
    %v308 = vld [vmem:[#allocation8 + $0x118] sm:$0xff]
    %v309 = vld [vmem:[#allocation8 + $0x120] sm:$0xff]
    %v310 = vld [vmem:[#allocation8 + $0x128] sm:$0xff]
    %v311 = vld [vmem:[#allocation8 + $0x130] sm:$0xff]
    %v312 = vld [vmem:[#allocation8 + $0x138] sm:$0xff]
    %v313 = vld [vmem:[#allocation8 + $0x140] sm:$0xff]
    %v314 = vld [vmem:[#allocation8 + $0x148] sm:$0xff]
    %v315 = vld [vmem:[#allocation8 + $0x150] sm:$0xff]
    %v316 = vld [vmem:[#allocation8 + $0x158] sm:$0xff]
    %v317 = vld [vmem:[#allocation8 + $0x160] sm:$0xff]
    %v318 = vld [vmem:[#allocation8 + $0x168] sm:$0xff]
    %v319 = vld [vmem:[#allocation8 + $0x170] sm:$0xff]
    %v320 = vld [vmem:[#allocation8 + $0x178] sm:$0xff]
    %v321 = vld [vmem:[#allocation8 + $0x180] sm:$0xff]
    %v322 = vld [vmem:[#allocation8 + $0x188] sm:$0xff]
    %v323 = vld [vmem:[#allocation8 + $0x190] sm:$0xff]
    %v324 = vld [vmem:[#allocation8 + $0x198] sm:$0xff]
    %v325 = vld [vmem:[#allocation8 + $0x1a0] sm:$0xff]
    %v326 = vld [vmem:[#allocation8 + $0x1a8] sm:$0xff]
    %v327 = vld [vmem:[#allocation8 + $0x1b0] sm:$0xff]
    %v328 = vld [vmem:[#allocation8 + $0x1b8] sm:$0xff]
    %v329 = vld [vmem:[#allocation8 + $0x1c0] sm:$0xff]
    %v330 = vld [vmem:[#allocation8 + $0x1c8] sm:$0xff]
    %v331 = vld [vmem:[#allocation8 + $0x1d0] sm:$0xff]
    %v332 = vld [vmem:[#allocation8 + $0x1d8] sm:$0xff]
    %v333 = vld [vmem:[#allocation8 + $0x1e0] sm:$0xff]
    %v334 = vld [vmem:[#allocation8 + $0x1e8] sm:$0xff]
    %v335 = vld [vmem:[#allocation8 + $0x1f0] sm:$0xff]
    %v336 = vld [vmem:[#allocation8 + $0x1f8] sm:$0xff]
    %v337 = vld [vmem:[#allocation8 + $0x200] sm:$0xff]
    %v338 = vld [vmem:[#allocation8 + $0x208] sm:$0xff]
    %v339 = vld [vmem:[#allocation8 + $0x210] sm:$0xff]
    %v340 = vld [vmem:[#allocation8 + $0x218] sm:$0xff]
    %v341 = vld [vmem:[#allocation8 + $0x220] sm:$0xff]
    %v342 = vld [vmem:[#allocation8 + $0x228] sm:$0xff]
    %v343 = vld [vmem:[#allocation8 + $0x230] sm:$0xff]
    %v344 = vld [vmem:[#allocation8 + $0x238] sm:$0xff]
    %v345 = vld [vmem:[#allocation8 + $0x240] sm:$0xff]
    %v346 = vld [vmem:[#allocation8 + $0x248] sm:$0xff]
    %v347 = vld [vmem:[#allocation8 + $0x250] sm:$0xff]
    %v348 = vld [vmem:[#allocation8 + $0x258] sm:$0xff]
    %v349 = vld [vmem:[#allocation8 + $0x260] sm:$0xff]
    %v350 = vld [vmem:[#allocation8 + $0x268] sm:$0xff]
    %v351 = vld [vmem:[#allocation8 + $0x270] sm:$0xff]
    %v352 = vld [vmem:[#allocation8 + $0x278] sm:$0xff]
    %v353 = vld [vmem:[#allocation8 + $0x280] sm:$0xff]
    %v354 = vld [vmem:[#allocation8 + $0x288] sm:$0xff]
    %v355 = vld [vmem:[#allocation8 + $0x290] sm:$0xff]
    %v356 = vld [vmem:[#allocation8 + $0x298] sm:$0xff]
    %v357 = vld [vmem:[#allocation8 + $0x2a0] sm:$0xff]
    %v358 = vld [vmem:[#allocation8 + $0x2a8] sm:$0xff]
    %v359 = vld [vmem:[#allocation8 + $0x2b0] sm:$0xff]
    %v360 = vld [vmem:[#allocation8 + $0x2b8] sm:$0xff]
    %v361 = vld [vmem:[#allocation8 + $0x2c0] sm:$0xff]
    %v362 = vld [vmem:[#allocation8 + $0x2c8] sm:$0xff]
    %v363 = vld [vmem:[#allocation8 + $0x2d0] sm:$0xff]
    %v364 = vld [vmem:[#allocation8 + $0x2d8] sm:$0xff]
    %v365 = vld [vmem:[#allocation8 + $0x2e0] sm:$0xff]
    %v366 = vld [vmem:[#allocation8 + $0x2e8] sm:$0xff]
    %v367 = vld [vmem:[#allocation8 + $0x2f0] sm:$0xff]
    %v368 = vld [vmem:[#allocation8 + $0x2f8] sm:$0xff]
    %v369 = vld [vmem:[#allocation8 + $0x300] sm:$0xff]
    %v370 = vld [vmem:[#allocation8 + $0x308] sm:$0xff]
    %v371 = vld [vmem:[#allocation8 + $0x310] sm:$0xff]
    %v372 = vld [vmem:[#allocation8 + $0x318] sm:$0xff]
    %v373 = vld [vmem:[#allocation8 + $0x320] sm:$0xff]
    %v374 = vld [vmem:[#allocation8 + $0x328] sm:$0xff]
    %v375 = vld [vmem:[#allocation8 + $0x330] sm:$0xff]
    %v376 = vld [vmem:[#allocation8 + $0x338] sm:$0xff]
    %v377 = vld [vmem:[#allocation8 + $0x340] sm:$0xff]
    %v378 = vld [vmem:[#allocation8 + $0x348] sm:$0xff]
    %v379 = vld [vmem:[#allocation8 + $0x350] sm:$0xff]
    %v380 = vld [vmem:[#allocation8 + $0x358] sm:$0xff]
    %v381 = vld [vmem:[#allocation8 + $0x360] sm:$0xff]
    %v382 = vld [vmem:[#allocation8 + $0x368] sm:$0xff]
    %v383 = vld [vmem:[#allocation8 + $0x370] sm:$0xff]
    %v384 = vld [vmem:[#allocation8 + $0x378] sm:$0xff]
    %v385 = vld [vmem:[#allocation8 + $0x380] sm:$0xff]
    %v386 = vld [vmem:[#allocation8 + $0x388] sm:$0xff]
    %v387 = vld [vmem:[#allocation8 + $0x390] sm:$0xff]
    %v388 = vld [vmem:[#allocation8 + $0x398] sm:$0xff]
    %v389 = vld [vmem:[#allocation8 + $0x3a0] sm:$0xff]
    %v390 = vld [vmem:[#allocation8 + $0x3a8] sm:$0xff]
    %v391 = vld [vmem:[#allocation8 + $0x3b0] sm:$0xff]
    %v392 = vld [vmem:[#allocation8 + $0x3b8] sm:$0xff]
    %v393 = vld [vmem:[#allocation8 + $0x3c0] sm:$0xff]
    %v394 = vld [vmem:[#allocation8 + $0x3c8] sm:$0xff]
    %v395 = vld [vmem:[#allocation8 + $0x3d0] sm:$0xff]
    %v396 = vld [vmem:[#allocation8 + $0x3d8] sm:$0xff]
    %v397 = vld [vmem:[#allocation8 + $0x3e0] sm:$0xff]
    %v398 = vld [vmem:[#allocation8 + $0x3e8] sm:$0xff]
    %v399 = vld [vmem:[#allocation8 + $0x3f0] sm:$0xff]
    %v400 = vld [vmem:[#allocation8 + $0x3f8] sm:$0xff]
    %v401 = vld [vmem:[#allocation8 + $0x400] sm:$0xff]
    %v402 = vld [vmem:[#allocation8 + $0x408] sm:$0xff]
    %v403 = vld [vmem:[#allocation8 + $0x410] sm:$0xff]
    %v404 = vld [vmem:[#allocation8 + $0x418] sm:$0xff]
    %v405 = vld [vmem:[#allocation8 + $0x420] sm:$0xff]
    %v406 = vld [vmem:[#allocation8 + $0x428] sm:$0xff]
    %v407 = vld [vmem:[#allocation8 + $0x430] sm:$0xff]
    %v408 = vld [vmem:[#allocation8 + $0x438] sm:$0xff]
    %v409 = vld [vmem:[#allocation8 + $0x440] sm:$0xff]
    %v410 = vld [vmem:[#allocation8 + $0x448] sm:$0xff]
    %v411 = vld [vmem:[#allocation8 + $0x450] sm:$0xff]
    %v412 = vld [vmem:[#allocation8 + $0x458] sm:$0xff]
    %v413 = vld [vmem:[#allocation8 + $0x460] sm:$0xff]
    %v414 = vld [vmem:[#allocation8 + $0x468] sm:$0xff]
    %v415 = vld [vmem:[#allocation8 + $0x470] sm:$0xff]
    %v416 = vld [vmem:[#allocation8 + $0x478] sm:$0xff]
    %v417 = vld [vmem:[#allocation8 + $0x480] sm:$0xff]
    %v418 = vld [vmem:[#allocation8 + $0x488] sm:$0xff]
    %v419 = vld [vmem:[#allocation8 + $0x490] sm:$0xff]
    %v420 = vld [vmem:[#allocation8 + $0x498] sm:$0xff]
    %v421 = vld [vmem:[#allocation8 + $0x4a0] sm:$0xff]
    %v422 = vld [vmem:[#allocation8 + $0x4a8] sm:$0xff]
    %v423 = vld [vmem:[#allocation8 + $0x4b0] sm:$0xff]
    %v424 = vld [vmem:[#allocation8 + $0x4b8] sm:$0xff]
    %v425 = vld [vmem:[#allocation8 + $0x4c0] sm:$0xff]
    %v426 = vld [vmem:[#allocation8 + $0x4c8] sm:$0xff]
    %v427 = vld [vmem:[#allocation8 + $0x4d0] sm:$0xff]
    %v428 = vld [vmem:[#allocation8 + $0x4d8] sm:$0xff]
    %v429 = vld [vmem:[#allocation8 + $0x4e0] sm:$0xff]
    %v430 = vld [vmem:[#allocation8 + $0x4e8] sm:$0xff]
    %v431 = vld [vmem:[#allocation8 + $0x4f0] sm:$0xff]
    %v432 = vld [vmem:[#allocation8 + $0x4f8] sm:$0xff]
    %v433 = vld [vmem:[#allocation8 + $0x500] sm:$0xff]
    %v434 = vld [vmem:[#allocation8 + $0x508] sm:$0xff]
    %v435 = vld [vmem:[#allocation8 + $0x510] sm:$0xff]
    %v436 = vld [vmem:[#allocation8 + $0x518] sm:$0xff]
    %v437 = vld [vmem:[#allocation8 + $0x520] sm:$0xff]
    %v438 = vld [vmem:[#allocation8 + $0x528] sm:$0xff]
    %v439 = vld [vmem:[#allocation8 + $0x530] sm:$0xff]
    %v440 = vld [vmem:[#allocation8 + $0x538] sm:$0xff]
    %v441 = vld [vmem:[#allocation8 + $0x540] sm:$0xff]
    %v442 = vld [vmem:[#allocation8 + $0x548] sm:$0xff]
    %v443 = vld [vmem:[#allocation8 + $0x550] sm:$0xff]
    %v444 = vld [vmem:[#allocation8 + $0x558] sm:$0xff]
    %v445 = vld [vmem:[#allocation8 + $0x560] sm:$0xff]
    %v446 = vld [vmem:[#allocation8 + $0x568] sm:$0xff]
    %v447 = vld [vmem:[#allocation8 + $0x570] sm:$0xff]
    %v448 = vld [vmem:[#allocation8 + $0x578] sm:$0xff]
    %v449 = vld [vmem:[#allocation8 + $0x580] sm:$0xff]
    %v450 = vld [vmem:[#allocation8 + $0x588] sm:$0xff]
    %v451 = vld [vmem:[#allocation8 + $0x590] sm:$0xff]
    %v452 = vld [vmem:[#allocation8 + $0x598] sm:$0xff]
    %v453 = vld [vmem:[#allocation8 + $0x5a0] sm:$0xff]
    %v454 = vld [vmem:[#allocation8 + $0x5a8] sm:$0xff]
    %v455 = vld [vmem:[#allocation8 + $0x5b0] sm:$0xff]
    %v456 = vld [vmem:[#allocation8 + $0x5b8] sm:$0xff]
    %v457 = vld [vmem:[#allocation8 + $0x5c0] sm:$0xff]
    %v458 = vld [vmem:[#allocation8 + $0x5c8] sm:$0xff]
    %v459 = vld [vmem:[#allocation8 + $0x5d0] sm:$0xff]
    %v460 = vld [vmem:[#allocation8 + $0x5d8] sm:$0xff]
    %v461 = vld [vmem:[#allocation8 + $0x5e0] sm:$0xff]
    %v462 = vld [vmem:[#allocation8 + $0x5e8] sm:$0xff]
    %v463 = vld [vmem:[#allocation8 + $0x5f0] sm:$0xff]
    %v464 = vld [vmem:[#allocation8 + $0x5f8] sm:$0xff]
    %v465 = vld [vmem:[#allocation8 + $0x600] sm:$0xff]
    %v466 = vld [vmem:[#allocation8 + $0x608] sm:$0xff]
    %v467 = vld [vmem:[#allocation8 + $0x610] sm:$0xff]
    %v468 = vld [vmem:[#allocation8 + $0x618] sm:$0xff]
    %v469 = vld [vmem:[#allocation8 + $0x620] sm:$0xff]
    %v470 = vld [vmem:[#allocation8 + $0x628] sm:$0xff]
    %v471 = vld [vmem:[#allocation8 + $0x630] sm:$0xff]
    %v472 = vld [vmem:[#allocation8 + $0x638] sm:$0xff]
    %v473 = vld [vmem:[#allocation8 + $0x640] sm:$0xff]
    %v474 = vld [vmem:[#allocation8 + $0x648] sm:$0xff]
    %v475 = vld [vmem:[#allocation8 + $0x650] sm:$0xff]
    %v476 = vld [vmem:[#allocation8 + $0x658] sm:$0xff]
    %v477 = vld [vmem:[#allocation8 + $0x660] sm:$0xff]
    %v478 = vld [vmem:[#allocation8 + $0x668] sm:$0xff]
    %v479 = vld [vmem:[#allocation8 + $0x670] sm:$0xff]
    %v480 = vld [vmem:[#allocation8 + $0x678] sm:$0xff]
    %v481 = vld [vmem:[#allocation8 + $0x680] sm:$0xff]
    %v482 = vld [vmem:[#allocation8 + $0x688] sm:$0xff]
    %v483 = vld [vmem:[#allocation8 + $0x690] sm:$0xff]
    %v484 = vld [vmem:[#allocation8 + $0x698] sm:$0xff]
    %v485 = vld [vmem:[#allocation8 + $0x6a0] sm:$0xff]
    %v486 = vld [vmem:[#allocation8 + $0x6a8] sm:$0xff]
    %v487 = vld [vmem:[#allocation8 + $0x6b0] sm:$0xff]
    %v488 = vld [vmem:[#allocation8 + $0x6b8] sm:$0xff]
    %v489 = vld [vmem:[#allocation8 + $0x6c0] sm:$0xff]
    %v490 = vld [vmem:[#allocation8 + $0x6c8] sm:$0xff]
    %v491 = vld [vmem:[#allocation8 + $0x6d0] sm:$0xff]
    %v492 = vld [vmem:[#allocation8 + $0x6d8] sm:$0xff]
    %v493 = vld [vmem:[#allocation8 + $0x6e0] sm:$0xff]
    %v494 = vld [vmem:[#allocation8 + $0x6e8] sm:$0xff]
    %v495 = vld [vmem:[#allocation8 + $0x6f0] sm:$0xff]
    %v496 = vld [vmem:[#allocation8 + $0x6f8] sm:$0xff]
    %v497 = vld [vmem:[#allocation8 + $0x700] sm:$0xff]
    %v498 = vld [vmem:[#allocation8 + $0x708] sm:$0xff]
    %v499 = vld [vmem:[#allocation8 + $0x710] sm:$0xff]
    %v500 = vld [vmem:[#allocation8 + $0x718] sm:$0xff]
    %v501 = vld [vmem:[#allocation8 + $0x720] sm:$0xff]
    %v502 = vld [vmem:[#allocation8 + $0x728] sm:$0xff]
    %v503 = vld [vmem:[#allocation8 + $0x730] sm:$0xff]
    %v504 = vld [vmem:[#allocation8 + $0x738] sm:$0xff]
    %v505 = vld [vmem:[#allocation8 + $0x740] sm:$0xff]
    %v506 = vld [vmem:[#allocation8 + $0x748] sm:$0xff]
    %v507 = vld [vmem:[#allocation8 + $0x750] sm:$0xff]
    %v508 = vld [vmem:[#allocation8 + $0x758] sm:$0xff]
    %v509 = vld [vmem:[#allocation8 + $0x760] sm:$0xff]
    %v510 = vld [vmem:[#allocation8 + $0x768] sm:$0xff]
    %v511 = vld [vmem:[#allocation8 + $0x770] sm:$0xff]
    %v512 = vld [vmem:[#allocation8 + $0x778] sm:$0xff]
    %v513 = vld [vmem:[#allocation8 + $0x780] sm:$0xff]
    %v514 = vld [vmem:[#allocation8 + $0x788] sm:$0xff]
    %v515 = vld [vmem:[#allocation8 + $0x790] sm:$0xff]
    %v516 = vld [vmem:[#allocation8 + $0x798] sm:$0xff]
    %v517 = vld [vmem:[#allocation8 + $0x7a0] sm:$0xff]
    %v518 = vld [vmem:[#allocation8 + $0x7a8] sm:$0xff]
    %v519 = vld [vmem:[#allocation8 + $0x7b0] sm:$0xff]
    %v520 = vld [vmem:[#allocation8 + $0x7b8] sm:$0xff]
    %v521 = vld [vmem:[#allocation8 + $0x7c0] sm:$0xff]
    %v522 = vld [vmem:[#allocation8 + $0x7c8] sm:$0xff]
    %v523 = vld [vmem:[#allocation8 + $0x7d0] sm:$0xff]
    %v524 = vld [vmem:[#allocation8 + $0x7d8] sm:$0xff]
    %v525 = vld [vmem:[#allocation8 + $0x7e0] sm:$0xff]
    %v526 = vld [vmem:[#allocation8 + $0x7e8] sm:$0xff]
    %v527 = vld [vmem:[#allocation8 + $0x7f0] sm:$0xff]
    %v528 = vld [vmem:[#allocation8 + $0x7f8] sm:$0xff]
    %v530 = vlaneseq
    %v531 = vshrl.u32 %v530, 7
    %v532 = vsub.s32 0, %v531
    %v533 = vrot.slane %v94, %v532
    %v534 = vlaneseq
    %v535 = vshrl.u32 %v534, 7
    %v536 = vsub.s32 1, %v535
    %v537 = vrot.slane %v94, %v536
    %v538 = vlaneseq
    %v539 = vshrl.u32 %v538, 7
    %v540 = vsub.s32 2, %v539
    %v541 = vrot.slane %v94, %v540
    %v542 = vlaneseq
    %v543 = vshrl.u32 %v542, 7
    %v544 = vsub.s32 3, %v543
    %v545 = vrot.slane %v94, %v544
    %v546 = vlaneseq
    %v547 = vshrl.u32 %v546, 7
    %v548 = vsub.s32 4, %v547
    %v549 = vrot.slane %v94, %v548
    %v550 = vlaneseq
    %v551 = vshrl.u32 %v550, 7
    %v552 = vsub.s32 5, %v551
    %v553 = vrot.slane %v94, %v552
    %v554 = vlaneseq
    %v555 = vshrl.u32 %v554, 7
    %v556 = vsub.s32 6, %v555
    %v557 = vrot.slane %v94, %v556
    %v558 = vlaneseq
    %v559 = vshrl.u32 %v558, 7
    %v560 = vsub.s32 7, %v559
    %v561 = vrot.slane %v94, %v560
    %v826 = vunpack.c.l.b16 %v273
    %v827 = vunpack.c.h.b16 %v273
    %v828 = vunpack.c.l.b16 %v274
    %v829 = vunpack.c.h.b16 %v274
    %v830 = vunpack.c.l.b16 %v275
    %v831 = vunpack.c.h.b16 %v275
    %v832 = vunpack.c.l.b16 %v276
    %v833 = vunpack.c.h.b16 %v276
    %v834 = vunpack.c.l.b16 %v277
    %v835 = vunpack.c.h.b16 %v277
    %v836 = vunpack.c.l.b16 %v278
    %v837 = vunpack.c.h.b16 %v278
    %v838 = vunpack.c.l.b16 %v279
    %v839 = vunpack.c.h.b16 %v279
    %v840 = vunpack.c.l.b16 %v280
    %v841 = vunpack.c.h.b16 %v280
    %v842 = vunpack.c.l.b16 %v281
    %v843 = vunpack.c.h.b16 %v281
    %v844 = vunpack.c.l.b16 %v282
    %v845 = vunpack.c.h.b16 %v282
    %v846 = vunpack.c.l.b16 %v283
    %v847 = vunpack.c.h.b16 %v283
    %v848 = vunpack.c.l.b16 %v284
    %v849 = vunpack.c.h.b16 %v284
    %v850 = vunpack.c.l.b16 %v285
    %v851 = vunpack.c.h.b16 %v285
    %v852 = vunpack.c.l.b16 %v286
    %v853 = vunpack.c.h.b16 %v286
    %v854 = vunpack.c.l.b16 %v287
    %v855 = vunpack.c.h.b16 %v287
    %v856 = vunpack.c.l.b16 %v288
    %v857 = vunpack.c.h.b16 %v288
    %v858 = vunpack.c.l.b16 %v289
    %v859 = vunpack.c.h.b16 %v289
    %v860 = vunpack.c.l.b16 %v290
    %v861 = vunpack.c.h.b16 %v290
    %v862 = vunpack.c.l.b16 %v291
    %v863 = vunpack.c.h.b16 %v291
    %v864 = vunpack.c.l.b16 %v292
    %v865 = vunpack.c.h.b16 %v292
    %v866 = vunpack.c.l.b16 %v293
    %v867 = vunpack.c.h.b16 %v293
    %v868 = vunpack.c.l.b16 %v294
    %v869 = vunpack.c.h.b16 %v294
    %v870 = vunpack.c.l.b16 %v295
    %v871 = vunpack.c.h.b16 %v295
    %v872 = vunpack.c.l.b16 %v296
    %v873 = vunpack.c.h.b16 %v296
    %v874 = vunpack.c.l.b16 %v297
    %v875 = vunpack.c.h.b16 %v297
    %v876 = vunpack.c.l.b16 %v298
    %v877 = vunpack.c.h.b16 %v298
    %v878 = vunpack.c.l.b16 %v299
    %v879 = vunpack.c.h.b16 %v299
    %v880 = vunpack.c.l.b16 %v300
    %v881 = vunpack.c.h.b16 %v300
    %v882 = vunpack.c.l.b16 %v301
    %v883 = vunpack.c.h.b16 %v301
    %v884 = vunpack.c.l.b16 %v302
    %v885 = vunpack.c.h.b16 %v302
    %v886 = vunpack.c.l.b16 %v303
    %v887 = vunpack.c.h.b16 %v303
    %v888 = vunpack.c.l.b16 %v304
    %v889 = vunpack.c.h.b16 %v304
    %v890 = vunpack.c.l.b16 %v305
    %v891 = vunpack.c.h.b16 %v305
    %v892 = vunpack.c.l.b16 %v306
    %v893 = vunpack.c.h.b16 %v306
    %v894 = vunpack.c.l.b16 %v307
    %v895 = vunpack.c.h.b16 %v307
    %v896 = vunpack.c.l.b16 %v308
    %v897 = vunpack.c.h.b16 %v308
    %v898 = vunpack.c.l.b16 %v309
    %v899 = vunpack.c.h.b16 %v309
    %v900 = vunpack.c.l.b16 %v310
    %v901 = vunpack.c.h.b16 %v310
    %v902 = vunpack.c.l.b16 %v311
    %v903 = vunpack.c.h.b16 %v311
    %v904 = vunpack.c.l.b16 %v312
    %v905 = vunpack.c.h.b16 %v312
    %v906 = vunpack.c.l.b16 %v313
    %v907 = vunpack.c.h.b16 %v313
    %v908 = vunpack.c.l.b16 %v314
    %v909 = vunpack.c.h.b16 %v314
    %v910 = vunpack.c.l.b16 %v315
    %v911 = vunpack.c.h.b16 %v315
    %v912 = vunpack.c.l.b16 %v316
    %v913 = vunpack.c.h.b16 %v316
    %v914 = vunpack.c.l.b16 %v317
    %v915 = vunpack.c.h.b16 %v317
    %v916 = vunpack.c.l.b16 %v318
    %v917 = vunpack.c.h.b16 %v318
    %v918 = vunpack.c.l.b16 %v319
    %v919 = vunpack.c.h.b16 %v319
    %v920 = vunpack.c.l.b16 %v320
    %v921 = vunpack.c.h.b16 %v320
    %v922 = vunpack.c.l.b16 %v321
    %v923 = vunpack.c.h.b16 %v321
    %v924 = vunpack.c.l.b16 %v322
    %v925 = vunpack.c.h.b16 %v322
    %v926 = vunpack.c.l.b16 %v323
    %v927 = vunpack.c.h.b16 %v323
    %v928 = vunpack.c.l.b16 %v324
    %v929 = vunpack.c.h.b16 %v324
    %v930 = vunpack.c.l.b16 %v325
    %v931 = vunpack.c.h.b16 %v325
    %v932 = vunpack.c.l.b16 %v326
    %v933 = vunpack.c.h.b16 %v326
    %v934 = vunpack.c.l.b16 %v327
    %v935 = vunpack.c.h.b16 %v327
    %v936 = vunpack.c.l.b16 %v328
    %v937 = vunpack.c.h.b16 %v328
    %v938 = vunpack.c.l.b16 %v329
    %v939 = vunpack.c.h.b16 %v329
    %v940 = vunpack.c.l.b16 %v330
    %v941 = vunpack.c.h.b16 %v330
    %v942 = vunpack.c.l.b16 %v331
    %v943 = vunpack.c.h.b16 %v331
    %v944 = vunpack.c.l.b16 %v332
    %v945 = vunpack.c.h.b16 %v332
    %v946 = vunpack.c.l.b16 %v333
    %v947 = vunpack.c.h.b16 %v333
    %v948 = vunpack.c.l.b16 %v334
    %v949 = vunpack.c.h.b16 %v334
    %v950 = vunpack.c.l.b16 %v335
    %v951 = vunpack.c.h.b16 %v335
    %v952 = vunpack.c.l.b16 %v336
    %v953 = vunpack.c.h.b16 %v336
    %v954 = vunpack.c.l.b16 %v337
    %v955 = vunpack.c.h.b16 %v337
    %v956 = vunpack.c.l.b16 %v338
    %v957 = vunpack.c.h.b16 %v338
    %v958 = vunpack.c.l.b16 %v339
    %v959 = vunpack.c.h.b16 %v339
    %v960 = vunpack.c.l.b16 %v340
    %v961 = vunpack.c.h.b16 %v340
    %v962 = vunpack.c.l.b16 %v341
    %v963 = vunpack.c.h.b16 %v341
    %v964 = vunpack.c.l.b16 %v342
    %v965 = vunpack.c.h.b16 %v342
    %v966 = vunpack.c.l.b16 %v343
    %v967 = vunpack.c.h.b16 %v343
    %v968 = vunpack.c.l.b16 %v344
    %v969 = vunpack.c.h.b16 %v344
    %v970 = vunpack.c.l.b16 %v345
    %v971 = vunpack.c.h.b16 %v345
    %v972 = vunpack.c.l.b16 %v346
    %v973 = vunpack.c.h.b16 %v346
    %v974 = vunpack.c.l.b16 %v347
    %v975 = vunpack.c.h.b16 %v347
    %v976 = vunpack.c.l.b16 %v348
    %v977 = vunpack.c.h.b16 %v348
    %v978 = vunpack.c.l.b16 %v349
    %v979 = vunpack.c.h.b16 %v349
    %v980 = vunpack.c.l.b16 %v350
    %v981 = vunpack.c.h.b16 %v350
    %v982 = vunpack.c.l.b16 %v351
    %v983 = vunpack.c.h.b16 %v351
    %v984 = vunpack.c.l.b16 %v352
    %v985 = vunpack.c.h.b16 %v352
    %v986 = vunpack.c.l.b16 %v353
    %v987 = vunpack.c.h.b16 %v353
    %v988 = vunpack.c.l.b16 %v354
    %v989 = vunpack.c.h.b16 %v354
    %v990 = vunpack.c.l.b16 %v355
    %v991 = vunpack.c.h.b16 %v355
    %v992 = vunpack.c.l.b16 %v356
    %v993 = vunpack.c.h.b16 %v356
    %v994 = vunpack.c.l.b16 %v357
    %v995 = vunpack.c.h.b16 %v357
    %v996 = vunpack.c.l.b16 %v358
    %v997 = vunpack.c.h.b16 %v358
    %v998 = vunpack.c.l.b16 %v359
    %v999 = vunpack.c.h.b16 %v359
    %v1000 = vunpack.c.l.b16 %v360
    %v1001 = vunpack.c.h.b16 %v360
    %v1002 = vunpack.c.l.b16 %v361
    %v1003 = vunpack.c.h.b16 %v361
    %v1004 = vunpack.c.l.b16 %v362
    %v1005 = vunpack.c.h.b16 %v362
    %v1006 = vunpack.c.l.b16 %v363
    %v1007 = vunpack.c.h.b16 %v363
    %v1008 = vunpack.c.l.b16 %v364
    %v1009 = vunpack.c.h.b16 %v364
    %v1010 = vunpack.c.l.b16 %v365
    %v1011 = vunpack.c.h.b16 %v365
    %v1012 = vunpack.c.l.b16 %v366
    %v1013 = vunpack.c.h.b16 %v366
    %v1014 = vunpack.c.l.b16 %v367
    %v1015 = vunpack.c.h.b16 %v367
    %v1016 = vunpack.c.l.b16 %v368
    %v1017 = vunpack.c.h.b16 %v368
    %v1018 = vunpack.c.l.b16 %v369
    %v1019 = vunpack.c.h.b16 %v369
    %v1020 = vunpack.c.l.b16 %v370
    %v1021 = vunpack.c.h.b16 %v370
    %v1022 = vunpack.c.l.b16 %v371
    %v1023 = vunpack.c.h.b16 %v371
    %v1024 = vunpack.c.l.b16 %v372
    %v1025 = vunpack.c.h.b16 %v372
    %v1026 = vunpack.c.l.b16 %v373
    %v1027 = vunpack.c.h.b16 %v373
    %v1028 = vunpack.c.l.b16 %v374
    %v1029 = vunpack.c.h.b16 %v374
    %v1030 = vunpack.c.l.b16 %v375
    %v1031 = vunpack.c.h.b16 %v375
    %v1032 = vunpack.c.l.b16 %v376
    %v1033 = vunpack.c.h.b16 %v376
    %v1034 = vunpack.c.l.b16 %v377
    %v1035 = vunpack.c.h.b16 %v377
    %v1036 = vunpack.c.l.b16 %v378
    %v1037 = vunpack.c.h.b16 %v378
    %v1038 = vunpack.c.l.b16 %v379
    %v1039 = vunpack.c.h.b16 %v379
    %v1040 = vunpack.c.l.b16 %v380
    %v1041 = vunpack.c.h.b16 %v380
    %v1042 = vunpack.c.l.b16 %v381
    %v1043 = vunpack.c.h.b16 %v381
    %v1044 = vunpack.c.l.b16 %v382
    %v1045 = vunpack.c.h.b16 %v382
    %v1046 = vunpack.c.l.b16 %v383
    %v1047 = vunpack.c.h.b16 %v383
    %v1048 = vunpack.c.l.b16 %v384
    %v1049 = vunpack.c.h.b16 %v384
    %v1050 = vunpack.c.l.b16 %v385
    %v1051 = vunpack.c.h.b16 %v385
    %v1052 = vunpack.c.l.b16 %v386
    %v1053 = vunpack.c.h.b16 %v386
    %v1054 = vunpack.c.l.b16 %v387
    %v1055 = vunpack.c.h.b16 %v387
    %v1056 = vunpack.c.l.b16 %v388
    %v1057 = vunpack.c.h.b16 %v388
    %v1058 = vunpack.c.l.b16 %v389
    %v1059 = vunpack.c.h.b16 %v389
    %v1060 = vunpack.c.l.b16 %v390
    %v1061 = vunpack.c.h.b16 %v390
    %v1062 = vunpack.c.l.b16 %v391
    %v1063 = vunpack.c.h.b16 %v391
    %v1064 = vunpack.c.l.b16 %v392
    %v1065 = vunpack.c.h.b16 %v392
    %v1066 = vunpack.c.l.b16 %v393
    %v1067 = vunpack.c.h.b16 %v393
    %v1068 = vunpack.c.l.b16 %v394
    %v1069 = vunpack.c.h.b16 %v394
    %v1070 = vunpack.c.l.b16 %v395
    %v1071 = vunpack.c.h.b16 %v395
    %v1072 = vunpack.c.l.b16 %v396
    %v1073 = vunpack.c.h.b16 %v396
    %v1074 = vunpack.c.l.b16 %v397
    %v1075 = vunpack.c.h.b16 %v397
    %v1076 = vunpack.c.l.b16 %v398
    %v1077 = vunpack.c.h.b16 %v398
    %v1078 = vunpack.c.l.b16 %v399
    %v1079 = vunpack.c.h.b16 %v399
    %v1080 = vunpack.c.l.b16 %v400
    %v1081 = vunpack.c.h.b16 %v400
    %v1082 = vunpack.c.l.b16 %v401
    %v1083 = vunpack.c.h.b16 %v401
    %v1084 = vunpack.c.l.b16 %v402
    %v1085 = vunpack.c.h.b16 %v402
    %v1086 = vunpack.c.l.b16 %v403
    %v1087 = vunpack.c.h.b16 %v403
    %v1088 = vunpack.c.l.b16 %v404
    %v1089 = vunpack.c.h.b16 %v404
    %v1090 = vunpack.c.l.b16 %v405
    %v1091 = vunpack.c.h.b16 %v405
    %v1092 = vunpack.c.l.b16 %v406
    %v1093 = vunpack.c.h.b16 %v406
    %v1094 = vunpack.c.l.b16 %v407
    %v1095 = vunpack.c.h.b16 %v407
    %v1096 = vunpack.c.l.b16 %v408
    %v1097 = vunpack.c.h.b16 %v408
    %v1098 = vunpack.c.l.b16 %v409
    %v1099 = vunpack.c.h.b16 %v409
    %v1100 = vunpack.c.l.b16 %v410
    %v1101 = vunpack.c.h.b16 %v410
    %v1102 = vunpack.c.l.b16 %v411
    %v1103 = vunpack.c.h.b16 %v411
    %v1104 = vunpack.c.l.b16 %v412
    %v1105 = vunpack.c.h.b16 %v412
    %v1106 = vunpack.c.l.b16 %v413
    %v1107 = vunpack.c.h.b16 %v413
    %v1108 = vunpack.c.l.b16 %v414
    %v1109 = vunpack.c.h.b16 %v414
    %v1110 = vunpack.c.l.b16 %v415
    %v1111 = vunpack.c.h.b16 %v415
    %v1112 = vunpack.c.l.b16 %v416
    %v1113 = vunpack.c.h.b16 %v416
    %v1114 = vunpack.c.l.b16 %v417
    %v1115 = vunpack.c.h.b16 %v417
    %v1116 = vunpack.c.l.b16 %v418
    %v1117 = vunpack.c.h.b16 %v418
    %v1118 = vunpack.c.l.b16 %v419
    %v1119 = vunpack.c.h.b16 %v419
    %v1120 = vunpack.c.l.b16 %v420
    %v1121 = vunpack.c.h.b16 %v420
    %v1122 = vunpack.c.l.b16 %v421
    %v1123 = vunpack.c.h.b16 %v421
    %v1124 = vunpack.c.l.b16 %v422
    %v1125 = vunpack.c.h.b16 %v422
    %v1126 = vunpack.c.l.b16 %v423
    %v1127 = vunpack.c.h.b16 %v423
    %v1128 = vunpack.c.l.b16 %v424
    %v1129 = vunpack.c.h.b16 %v424
    %v1130 = vunpack.c.l.b16 %v425
    %v1131 = vunpack.c.h.b16 %v425
    %v1132 = vunpack.c.l.b16 %v426
    %v1133 = vunpack.c.h.b16 %v426
    %v1134 = vunpack.c.l.b16 %v427
    %v1135 = vunpack.c.h.b16 %v427
    %v1136 = vunpack.c.l.b16 %v428
    %v1137 = vunpack.c.h.b16 %v428
    %v1138 = vunpack.c.l.b16 %v429
    %v1139 = vunpack.c.h.b16 %v429
    %v1140 = vunpack.c.l.b16 %v430
    %v1141 = vunpack.c.h.b16 %v430
    %v1142 = vunpack.c.l.b16 %v431
    %v1143 = vunpack.c.h.b16 %v431
    %v1144 = vunpack.c.l.b16 %v432
    %v1145 = vunpack.c.h.b16 %v432
    %v1146 = vunpack.c.l.b16 %v433
    %v1147 = vunpack.c.h.b16 %v433
    %v1148 = vunpack.c.l.b16 %v434
    %v1149 = vunpack.c.h.b16 %v434
    %v1150 = vunpack.c.l.b16 %v435
    %v1151 = vunpack.c.h.b16 %v435
    %v1152 = vunpack.c.l.b16 %v436
    %v1153 = vunpack.c.h.b16 %v436
    %v1154 = vunpack.c.l.b16 %v437
    %v1155 = vunpack.c.h.b16 %v437
    %v1156 = vunpack.c.l.b16 %v438
    %v1157 = vunpack.c.h.b16 %v438
    %v1158 = vunpack.c.l.b16 %v439
    %v1159 = vunpack.c.h.b16 %v439
    %v1160 = vunpack.c.l.b16 %v440
    %v1161 = vunpack.c.h.b16 %v440
    %v1162 = vunpack.c.l.b16 %v441
    %v1163 = vunpack.c.h.b16 %v441
    %v1164 = vunpack.c.l.b16 %v442
    %v1165 = vunpack.c.h.b16 %v442
    %v1166 = vunpack.c.l.b16 %v443
    %v1167 = vunpack.c.h.b16 %v443
    %v1168 = vunpack.c.l.b16 %v444
    %v1169 = vunpack.c.h.b16 %v444
    %v1170 = vunpack.c.l.b16 %v445
    %v1171 = vunpack.c.h.b16 %v445
    %v1172 = vunpack.c.l.b16 %v446
    %v1173 = vunpack.c.h.b16 %v446
    %v1174 = vunpack.c.l.b16 %v447
    %v1175 = vunpack.c.h.b16 %v447
    %v1176 = vunpack.c.l.b16 %v448
    %v1177 = vunpack.c.h.b16 %v448
    %v1178 = vunpack.c.l.b16 %v449
    %v1179 = vunpack.c.h.b16 %v449
    %v1180 = vunpack.c.l.b16 %v450
    %v1181 = vunpack.c.h.b16 %v450
    %v1182 = vunpack.c.l.b16 %v451
    %v1183 = vunpack.c.h.b16 %v451
    %v1184 = vunpack.c.l.b16 %v452
    %v1185 = vunpack.c.h.b16 %v452
    %v1186 = vunpack.c.l.b16 %v453
    %v1187 = vunpack.c.h.b16 %v453
    %v1188 = vunpack.c.l.b16 %v454
    %v1189 = vunpack.c.h.b16 %v454
    %v1190 = vunpack.c.l.b16 %v455
    %v1191 = vunpack.c.h.b16 %v455
    %v1192 = vunpack.c.l.b16 %v456
    %v1193 = vunpack.c.h.b16 %v456
    %v1194 = vunpack.c.l.b16 %v457
    %v1195 = vunpack.c.h.b16 %v457
    %v1196 = vunpack.c.l.b16 %v458
    %v1197 = vunpack.c.h.b16 %v458
    %v1198 = vunpack.c.l.b16 %v459
    %v1199 = vunpack.c.h.b16 %v459
    %v1200 = vunpack.c.l.b16 %v460
    %v1201 = vunpack.c.h.b16 %v460
    %v1202 = vunpack.c.l.b16 %v461
    %v1203 = vunpack.c.h.b16 %v461
    %v1204 = vunpack.c.l.b16 %v462
    %v1205 = vunpack.c.h.b16 %v462
    %v1206 = vunpack.c.l.b16 %v463
    %v1207 = vunpack.c.h.b16 %v463
    %v1208 = vunpack.c.l.b16 %v464
    %v1209 = vunpack.c.h.b16 %v464
    %v1210 = vunpack.c.l.b16 %v465
    %v1211 = vunpack.c.h.b16 %v465
    %v1212 = vunpack.c.l.b16 %v466
    %v1213 = vunpack.c.h.b16 %v466
    %v1214 = vunpack.c.l.b16 %v467
    %v1215 = vunpack.c.h.b16 %v467
    %v1216 = vunpack.c.l.b16 %v468
    %v1217 = vunpack.c.h.b16 %v468
    %v1218 = vunpack.c.l.b16 %v469
    %v1219 = vunpack.c.h.b16 %v469
    %v1220 = vunpack.c.l.b16 %v470
    %v1221 = vunpack.c.h.b16 %v470
    %v1222 = vunpack.c.l.b16 %v471
    %v1223 = vunpack.c.h.b16 %v471
    %v1224 = vunpack.c.l.b16 %v472
    %v1225 = vunpack.c.h.b16 %v472
    %v1226 = vunpack.c.l.b16 %v473
    %v1227 = vunpack.c.h.b16 %v473
    %v1228 = vunpack.c.l.b16 %v474
    %v1229 = vunpack.c.h.b16 %v474
    %v1230 = vunpack.c.l.b16 %v475
    %v1231 = vunpack.c.h.b16 %v475
    %v1232 = vunpack.c.l.b16 %v476
    %v1233 = vunpack.c.h.b16 %v476
    %v1234 = vunpack.c.l.b16 %v477
    %v1235 = vunpack.c.h.b16 %v477
    %v1236 = vunpack.c.l.b16 %v478
    %v1237 = vunpack.c.h.b16 %v478
    %v1238 = vunpack.c.l.b16 %v479
    %v1239 = vunpack.c.h.b16 %v479
    %v1240 = vunpack.c.l.b16 %v480
    %v1241 = vunpack.c.h.b16 %v480
    %v1242 = vunpack.c.l.b16 %v481
    %v1243 = vunpack.c.h.b16 %v481
    %v1244 = vunpack.c.l.b16 %v482
    %v1245 = vunpack.c.h.b16 %v482
    %v1246 = vunpack.c.l.b16 %v483
    %v1247 = vunpack.c.h.b16 %v483
    %v1248 = vunpack.c.l.b16 %v484
    %v1249 = vunpack.c.h.b16 %v484
    %v1250 = vunpack.c.l.b16 %v485
    %v1251 = vunpack.c.h.b16 %v485
    %v1252 = vunpack.c.l.b16 %v486
    %v1253 = vunpack.c.h.b16 %v486
    %v1254 = vunpack.c.l.b16 %v487
    %v1255 = vunpack.c.h.b16 %v487
    %v1256 = vunpack.c.l.b16 %v488
    %v1257 = vunpack.c.h.b16 %v488
    %v1258 = vunpack.c.l.b16 %v489
    %v1259 = vunpack.c.h.b16 %v489
    %v1260 = vunpack.c.l.b16 %v490
    %v1261 = vunpack.c.h.b16 %v490
    %v1262 = vunpack.c.l.b16 %v491
    %v1263 = vunpack.c.h.b16 %v491
    %v1264 = vunpack.c.l.b16 %v492
    %v1265 = vunpack.c.h.b16 %v492
    %v1266 = vunpack.c.l.b16 %v493
    %v1267 = vunpack.c.h.b16 %v493
    %v1268 = vunpack.c.l.b16 %v494
    %v1269 = vunpack.c.h.b16 %v494
    %v1270 = vunpack.c.l.b16 %v495
    %v1271 = vunpack.c.h.b16 %v495
    %v1272 = vunpack.c.l.b16 %v496
    %v1273 = vunpack.c.h.b16 %v496
    %v1274 = vunpack.c.l.b16 %v497
    %v1275 = vunpack.c.h.b16 %v497
    %v1276 = vunpack.c.l.b16 %v498
    %v1277 = vunpack.c.h.b16 %v498
    %v1278 = vunpack.c.l.b16 %v499
    %v1279 = vunpack.c.h.b16 %v499
    %v1280 = vunpack.c.l.b16 %v500
    %v1281 = vunpack.c.h.b16 %v500
    %v1282 = vunpack.c.l.b16 %v501
    %v1283 = vunpack.c.h.b16 %v501
    %v1284 = vunpack.c.l.b16 %v502
    %v1285 = vunpack.c.h.b16 %v502
    %v1286 = vunpack.c.l.b16 %v503
    %v1287 = vunpack.c.h.b16 %v503
    %v1288 = vunpack.c.l.b16 %v504
    %v1289 = vunpack.c.h.b16 %v504
    %v1290 = vunpack.c.l.b16 %v505
    %v1291 = vunpack.c.h.b16 %v505
    %v1292 = vunpack.c.l.b16 %v506
    %v1293 = vunpack.c.h.b16 %v506
    %v1294 = vunpack.c.l.b16 %v507
    %v1295 = vunpack.c.h.b16 %v507
    %v1296 = vunpack.c.l.b16 %v508
    %v1297 = vunpack.c.h.b16 %v508
    %v1298 = vunpack.c.l.b16 %v509
    %v1299 = vunpack.c.h.b16 %v509
    %v1300 = vunpack.c.l.b16 %v510
    %v1301 = vunpack.c.h.b16 %v510
    %v1302 = vunpack.c.l.b16 %v511
    %v1303 = vunpack.c.h.b16 %v511
    %v1304 = vunpack.c.l.b16 %v512
    %v1305 = vunpack.c.h.b16 %v512
    %v1306 = vunpack.c.l.b16 %v513
    %v1307 = vunpack.c.h.b16 %v513
    %v1308 = vunpack.c.l.b16 %v514
    %v1309 = vunpack.c.h.b16 %v514
    %v1310 = vunpack.c.l.b16 %v515
    %v1311 = vunpack.c.h.b16 %v515
    %v1312 = vunpack.c.l.b16 %v516
    %v1313 = vunpack.c.h.b16 %v516
    %v1314 = vunpack.c.l.b16 %v517
    %v1315 = vunpack.c.h.b16 %v517
    %v1316 = vunpack.c.l.b16 %v518
    %v1317 = vunpack.c.h.b16 %v518
    %v1318 = vunpack.c.l.b16 %v519
    %v1319 = vunpack.c.h.b16 %v519
    %v1320 = vunpack.c.l.b16 %v520
    %v1321 = vunpack.c.h.b16 %v520
    %v1322 = vunpack.c.l.b16 %v521
    %v1323 = vunpack.c.h.b16 %v521
    %v1324 = vunpack.c.l.b16 %v522
    %v1325 = vunpack.c.h.b16 %v522
    %v1326 = vunpack.c.l.b16 %v523
    %v1327 = vunpack.c.h.b16 %v523
    %v1328 = vunpack.c.l.b16 %v524
    %v1329 = vunpack.c.h.b16 %v524
    %v1330 = vunpack.c.l.b16 %v525
    %v1331 = vunpack.c.h.b16 %v525
    %v1332 = vunpack.c.l.b16 %v526
    %v1333 = vunpack.c.h.b16 %v526
    %v1334 = vunpack.c.l.b16 %v527
    %v1335 = vunpack.c.h.b16 %v527
    %v1336 = vunpack.c.l.b16 %v528
    %v1337 = vunpack.c.h.b16 %v528
    %v1338 = vpack.c.b16 %v834, %v826
    %v1339 = vpack.c.b16 %v835, %v827
    %v1340 = vpack.c.b16 %v836, %v828
    %v1341 = vpack.c.b16 %v837, %v829
    %v1342 = vpack.c.b16 %v838, %v830
    %v1343 = vpack.c.b16 %v839, %v831
    %v1344 = vpack.c.b16 %v840, %v832
    %v1345 = vpack.c.b16 %v841, %v833
    %v1346 = vpack.c.b16 %v850, %v842
    %v1347 = vpack.c.b16 %v851, %v843
    %v1348 = vpack.c.b16 %v852, %v844
    %v1349 = vpack.c.b16 %v853, %v845
    %v1350 = vpack.c.b16 %v854, %v846
    %v1351 = vpack.c.b16 %v855, %v847
    %v1352 = vpack.c.b16 %v856, %v848
    %v1353 = vpack.c.b16 %v857, %v849
    %v1354 = vpack.c.b16 %v866, %v858
    %v1355 = vpack.c.b16 %v867, %v859
    %v1356 = vpack.c.b16 %v868, %v860
    %v1357 = vpack.c.b16 %v869, %v861
    %v1358 = vpack.c.b16 %v870, %v862
    %v1359 = vpack.c.b16 %v871, %v863
    %v1360 = vpack.c.b16 %v872, %v864
    %v1361 = vpack.c.b16 %v873, %v865
    %v1362 = vpack.c.b16 %v882, %v874
    %v1363 = vpack.c.b16 %v883, %v875
    %v1364 = vpack.c.b16 %v884, %v876
    %v1365 = vpack.c.b16 %v885, %v877
    %v1366 = vpack.c.b16 %v886, %v878
    %v1367 = vpack.c.b16 %v887, %v879
    %v1368 = vpack.c.b16 %v888, %v880
    %v1369 = vpack.c.b16 %v889, %v881
    %v1370 = vpack.c.b16 %v898, %v890
    %v1371 = vpack.c.b16 %v899, %v891
    %v1372 = vpack.c.b16 %v900, %v892
    %v1373 = vpack.c.b16 %v901, %v893
    %v1374 = vpack.c.b16 %v902, %v894
    %v1375 = vpack.c.b16 %v903, %v895
    %v1376 = vpack.c.b16 %v904, %v896
    %v1377 = vpack.c.b16 %v905, %v897
    %v1378 = vpack.c.b16 %v914, %v906
    %v1379 = vpack.c.b16 %v915, %v907
    %v1380 = vpack.c.b16 %v916, %v908
    %v1381 = vpack.c.b16 %v917, %v909
    %v1382 = vpack.c.b16 %v918, %v910
    %v1383 = vpack.c.b16 %v919, %v911
    %v1384 = vpack.c.b16 %v920, %v912
    %v1385 = vpack.c.b16 %v921, %v913
    %v1386 = vpack.c.b16 %v930, %v922
    %v1387 = vpack.c.b16 %v931, %v923
    %v1388 = vpack.c.b16 %v932, %v924
    %v1389 = vpack.c.b16 %v933, %v925
    %v1390 = vpack.c.b16 %v934, %v926
    %v1391 = vpack.c.b16 %v935, %v927
    %v1392 = vpack.c.b16 %v936, %v928
    %v1393 = vpack.c.b16 %v937, %v929
    %v1394 = vpack.c.b16 %v946, %v938
    %v1395 = vpack.c.b16 %v947, %v939
    %v1396 = vpack.c.b16 %v948, %v940
    %v1397 = vpack.c.b16 %v949, %v941
    %v1398 = vpack.c.b16 %v950, %v942
    %v1399 = vpack.c.b16 %v951, %v943
    %v1400 = vpack.c.b16 %v952, %v944
    %v1401 = vpack.c.b16 %v953, %v945
    %v1402 = vpack.c.b16 %v962, %v954
    %v1403 = vpack.c.b16 %v963, %v955
    %v1404 = vpack.c.b16 %v964, %v956
    %v1405 = vpack.c.b16 %v965, %v957
    %v1406 = vpack.c.b16 %v966, %v958
    %v1407 = vpack.c.b16 %v967, %v959
    %v1408 = vpack.c.b16 %v968, %v960
    %v1409 = vpack.c.b16 %v969, %v961
    %v1410 = vpack.c.b16 %v978, %v970
    %v1411 = vpack.c.b16 %v979, %v971
    %v1412 = vpack.c.b16 %v980, %v972
    %v1413 = vpack.c.b16 %v981, %v973
    %v1414 = vpack.c.b16 %v982, %v974
    %v1415 = vpack.c.b16 %v983, %v975
    %v1416 = vpack.c.b16 %v984, %v976
    %v1417 = vpack.c.b16 %v985, %v977
    %v1418 = vpack.c.b16 %v994, %v986
    %v1419 = vpack.c.b16 %v995, %v987
    %v1420 = vpack.c.b16 %v996, %v988
    %v1421 = vpack.c.b16 %v997, %v989
    %v1422 = vpack.c.b16 %v998, %v990
    %v1423 = vpack.c.b16 %v999, %v991
    %v1424 = vpack.c.b16 %v1000, %v992
    %v1425 = vpack.c.b16 %v1001, %v993
    %v1426 = vpack.c.b16 %v1010, %v1002
    %v1427 = vpack.c.b16 %v1011, %v1003
    %v1428 = vpack.c.b16 %v1012, %v1004
    %v1429 = vpack.c.b16 %v1013, %v1005
    %v1430 = vpack.c.b16 %v1014, %v1006
    %v1431 = vpack.c.b16 %v1015, %v1007
    %v1432 = vpack.c.b16 %v1016, %v1008
    %v1433 = vpack.c.b16 %v1017, %v1009
    %v1434 = vpack.c.b16 %v1026, %v1018
    %v1435 = vpack.c.b16 %v1027, %v1019
    %v1436 = vpack.c.b16 %v1028, %v1020
    %v1437 = vpack.c.b16 %v1029, %v1021
    %v1438 = vpack.c.b16 %v1030, %v1022
    %v1439 = vpack.c.b16 %v1031, %v1023
    %v1440 = vpack.c.b16 %v1032, %v1024
    %v1441 = vpack.c.b16 %v1033, %v1025
    %v1442 = vpack.c.b16 %v1042, %v1034
    %v1443 = vpack.c.b16 %v1043, %v1035
    %v1444 = vpack.c.b16 %v1044, %v1036
    %v1445 = vpack.c.b16 %v1045, %v1037
    %v1446 = vpack.c.b16 %v1046, %v1038
    %v1447 = vpack.c.b16 %v1047, %v1039
    %v1448 = vpack.c.b16 %v1048, %v1040
    %v1449 = vpack.c.b16 %v1049, %v1041
    %v1450 = vpack.c.b16 %v1058, %v1050
    %v1451 = vpack.c.b16 %v1059, %v1051
    %v1452 = vpack.c.b16 %v1060, %v1052
    %v1453 = vpack.c.b16 %v1061, %v1053
    %v1454 = vpack.c.b16 %v1062, %v1054
    %v1455 = vpack.c.b16 %v1063, %v1055
    %v1456 = vpack.c.b16 %v1064, %v1056
    %v1457 = vpack.c.b16 %v1065, %v1057
    %v1458 = vpack.c.b16 %v1074, %v1066
    %v1459 = vpack.c.b16 %v1075, %v1067
    %v1460 = vpack.c.b16 %v1076, %v1068
    %v1461 = vpack.c.b16 %v1077, %v1069
    %v1462 = vpack.c.b16 %v1078, %v1070
    %v1463 = vpack.c.b16 %v1079, %v1071
    %v1464 = vpack.c.b16 %v1080, %v1072
    %v1465 = vpack.c.b16 %v1081, %v1073
    %v1466 = vpack.c.b16 %v1090, %v1082
    %v1467 = vpack.c.b16 %v1091, %v1083
    %v1468 = vpack.c.b16 %v1092, %v1084
    %v1469 = vpack.c.b16 %v1093, %v1085
    %v1470 = vpack.c.b16 %v1094, %v1086
    %v1471 = vpack.c.b16 %v1095, %v1087
    %v1472 = vpack.c.b16 %v1096, %v1088
    %v1473 = vpack.c.b16 %v1097, %v1089
    %v1474 = vpack.c.b16 %v1106, %v1098
    %v1475 = vpack.c.b16 %v1107, %v1099
    %v1476 = vpack.c.b16 %v1108, %v1100
    %v1477 = vpack.c.b16 %v1109, %v1101
    %v1478 = vpack.c.b16 %v1110, %v1102
    %v1479 = vpack.c.b16 %v1111, %v1103
    %v1480 = vpack.c.b16 %v1112, %v1104
    %v1481 = vpack.c.b16 %v1113, %v1105
    %v1482 = vpack.c.b16 %v1122, %v1114
    %v1483 = vpack.c.b16 %v1123, %v1115
    %v1484 = vpack.c.b16 %v1124, %v1116
    %v1485 = vpack.c.b16 %v1125, %v1117
    %v1486 = vpack.c.b16 %v1126, %v1118
    %v1487 = vpack.c.b16 %v1127, %v1119
    %v1488 = vpack.c.b16 %v1128, %v1120
    %v1489 = vpack.c.b16 %v1129, %v1121
    %v1490 = vpack.c.b16 %v1138, %v1130
    %v1491 = vpack.c.b16 %v1139, %v1131
    %v1492 = vpack.c.b16 %v1140, %v1132
    %v1493 = vpack.c.b16 %v1141, %v1133
    %v1494 = vpack.c.b16 %v1142, %v1134
    %v1495 = vpack.c.b16 %v1143, %v1135
    %v1496 = vpack.c.b16 %v1144, %v1136
    %v1497 = vpack.c.b16 %v1145, %v1137
    %v1498 = vpack.c.b16 %v1154, %v1146
    %v1499 = vpack.c.b16 %v1155, %v1147
    %v1500 = vpack.c.b16 %v1156, %v1148
    %v1501 = vpack.c.b16 %v1157, %v1149
    %v1502 = vpack.c.b16 %v1158, %v1150
    %v1503 = vpack.c.b16 %v1159, %v1151
    %v1504 = vpack.c.b16 %v1160, %v1152
    %v1505 = vpack.c.b16 %v1161, %v1153
    %v1506 = vpack.c.b16 %v1170, %v1162
    %v1507 = vpack.c.b16 %v1171, %v1163
    %v1508 = vpack.c.b16 %v1172, %v1164
    %v1509 = vpack.c.b16 %v1173, %v1165
    %v1510 = vpack.c.b16 %v1174, %v1166
    %v1511 = vpack.c.b16 %v1175, %v1167
    %v1512 = vpack.c.b16 %v1176, %v1168
    %v1513 = vpack.c.b16 %v1177, %v1169
    %v1514 = vpack.c.b16 %v1186, %v1178
    %v1515 = vpack.c.b16 %v1187, %v1179
    %v1516 = vpack.c.b16 %v1188, %v1180
    %v1517 = vpack.c.b16 %v1189, %v1181
    %v1518 = vpack.c.b16 %v1190, %v1182
    %v1519 = vpack.c.b16 %v1191, %v1183
    %v1520 = vpack.c.b16 %v1192, %v1184
    %v1521 = vpack.c.b16 %v1193, %v1185
    %v1522 = vpack.c.b16 %v1202, %v1194
    %v1523 = vpack.c.b16 %v1203, %v1195
    %v1524 = vpack.c.b16 %v1204, %v1196
    %v1525 = vpack.c.b16 %v1205, %v1197
    %v1526 = vpack.c.b16 %v1206, %v1198
    %v1527 = vpack.c.b16 %v1207, %v1199
    %v1528 = vpack.c.b16 %v1208, %v1200
    %v1529 = vpack.c.b16 %v1209, %v1201
    %v1530 = vpack.c.b16 %v1218, %v1210
    %v1531 = vpack.c.b16 %v1219, %v1211
    %v1532 = vpack.c.b16 %v1220, %v1212
    %v1533 = vpack.c.b16 %v1221, %v1213
    %v1534 = vpack.c.b16 %v1222, %v1214
    %v1535 = vpack.c.b16 %v1223, %v1215
    %v1536 = vpack.c.b16 %v1224, %v1216
    %v1537 = vpack.c.b16 %v1225, %v1217
    %v1538 = vpack.c.b16 %v1234, %v1226
    %v1539 = vpack.c.b16 %v1235, %v1227
    %v1540 = vpack.c.b16 %v1236, %v1228
    %v1541 = vpack.c.b16 %v1237, %v1229
    %v1542 = vpack.c.b16 %v1238, %v1230
    %v1543 = vpack.c.b16 %v1239, %v1231
    %v1544 = vpack.c.b16 %v1240, %v1232
    %v1545 = vpack.c.b16 %v1241, %v1233
    %v1546 = vpack.c.b16 %v1250, %v1242
    %v1547 = vpack.c.b16 %v1251, %v1243
    %v1548 = vpack.c.b16 %v1252, %v1244
    %v1549 = vpack.c.b16 %v1253, %v1245
    %v1550 = vpack.c.b16 %v1254, %v1246
    %v1551 = vpack.c.b16 %v1255, %v1247
    %v1552 = vpack.c.b16 %v1256, %v1248
    %v1553 = vpack.c.b16 %v1257, %v1249
    %v1554 = vpack.c.b16 %v1266, %v1258
    %v1555 = vpack.c.b16 %v1267, %v1259
    %v1556 = vpack.c.b16 %v1268, %v1260
    %v1557 = vpack.c.b16 %v1269, %v1261
    %v1558 = vpack.c.b16 %v1270, %v1262
    %v1559 = vpack.c.b16 %v1271, %v1263
    %v1560 = vpack.c.b16 %v1272, %v1264
    %v1561 = vpack.c.b16 %v1273, %v1265
    %v1562 = vpack.c.b16 %v1282, %v1274
    %v1563 = vpack.c.b16 %v1283, %v1275
    %v1564 = vpack.c.b16 %v1284, %v1276
    %v1565 = vpack.c.b16 %v1285, %v1277
    %v1566 = vpack.c.b16 %v1286, %v1278
    %v1567 = vpack.c.b16 %v1287, %v1279
    %v1568 = vpack.c.b16 %v1288, %v1280
    %v1569 = vpack.c.b16 %v1289, %v1281
    %v1570 = vpack.c.b16 %v1298, %v1290
    %v1571 = vpack.c.b16 %v1299, %v1291
    %v1572 = vpack.c.b16 %v1300, %v1292
    %v1573 = vpack.c.b16 %v1301, %v1293
    %v1574 = vpack.c.b16 %v1302, %v1294
    %v1575 = vpack.c.b16 %v1303, %v1295
    %v1576 = vpack.c.b16 %v1304, %v1296
    %v1577 = vpack.c.b16 %v1305, %v1297
    %v1578 = vpack.c.b16 %v1314, %v1306
    %v1579 = vpack.c.b16 %v1315, %v1307
    %v1580 = vpack.c.b16 %v1316, %v1308
    %v1581 = vpack.c.b16 %v1317, %v1309
    %v1582 = vpack.c.b16 %v1318, %v1310
    %v1583 = vpack.c.b16 %v1319, %v1311
    %v1584 = vpack.c.b16 %v1320, %v1312
    %v1585 = vpack.c.b16 %v1321, %v1313
    %v1586 = vpack.c.b16 %v1330, %v1322
    %v1587 = vpack.c.b16 %v1331, %v1323
    %v1588 = vpack.c.b16 %v1332, %v1324
    %v1589 = vpack.c.b16 %v1333, %v1325
    %v1590 = vpack.c.b16 %v1334, %v1326
    %v1591 = vpack.c.b16 %v1335, %v1327
    %v1592 = vpack.c.b16 %v1336, %v1328
    %v1593 = vpack.c.b16 %v1337, %v1329
    %1850 = vmatprep.subr.bf16.mxu0 %v1395
    %1851 = vmatpush1.bf16.msra.mxu0 %v1394
    %1852 = vmatprep.subr.bf16.mxu0 %v1387
    %1853 = vmatpush1.bf16.msra.mxu0 %v1386
    %1854 = vmatprep.subr.bf16.mxu0 %v1379
    %1855 = vmatpush1.bf16.msra.mxu0 %v1378
    %1856 = vmatprep.subr.bf16.mxu0 %v1371
    %1857 = vmatpush1.bf16.msra.mxu0 %v1370
    %1858 = vmatprep.subr.bf16.mxu0 %v1363
    %1859 = vmatpush1.bf16.msra.mxu0 %v1362
    %1860 = vmatprep.subr.bf16.mxu0 %v1355
    %1861 = vmatpush1.bf16.msra.mxu0 %v1354
    %1862 = vmatprep.subr.bf16.mxu0 %v1347
    %1863 = vmatpush1.bf16.msra.mxu0 %v1346
    %1864 = vmatprep.subr.bf16.mxu0 %v1339
    %1865 = vmatpush1.bf16.msra.mxu0 %v1338
    %1866 = vmatprep.subr.bf16.mxu0 %v1459
    %1867 = vmatpush2.bf16.msra.mxu0 %v1458
    %1868 = vmatprep.subr.bf16.mxu0 %v1451
    %1869 = vmatpush2.bf16.msra.mxu0 %v1450
    %1870 = vmatprep.subr.bf16.mxu0 %v1443
    %1871 = vmatpush2.bf16.msra.mxu0 %v1442
    %1872 = vmatprep.subr.bf16.mxu0 %v1435
    %1873 = vmatpush2.bf16.msra.mxu0 %v1434
    %1874 = vmatprep.subr.bf16.mxu0 %v1427
    %1875 = vmatpush2.bf16.msra.mxu0 %v1426
    %1876 = vmatprep.subr.bf16.mxu0 %v1419
    %1877 = vmatpush2.bf16.msra.mxu0 %v1418
    %1878 = vmatprep.subr.bf16.mxu0 %v1411
    %1879 = vmatpush2.bf16.msra.mxu0 %v1410
    %1880 = vmatprep.subr.bf16.mxu0 %v1403
    %1881 = vmatpush2.bf16.msra.mxu0 %v1402
    %1882 = vmatprep.mubr.bf16.mxu0 %v270
    %1883 = vmatmul.mubr.bf16.gmra.mxu0 %v269
    %v1884 = vpop.f32.mrf.mxu0
    %v1885 = vadd.f32 %v533, %v1884
    %v1886 = vpop.f32.mrf.mxu0
    %v1887 = vadd.f32 %v537, %v1886
    %v1888 = vpop.f32.mrf.mxu0
    %v1889 = vadd.f32 %v533, %v1888
    %v1890 = vpop.f32.mrf.mxu0
    %v1891 = vadd.f32 %v537, %v1890
    %1892 = vdwg.mxu0
    %1893 = vmatprep.subr.bf16.mxu0 %v1523
    %1894 = vmatpush1.bf16.msra.mxu0 %v1522
    %1895 = vmatprep.subr.bf16.mxu0 %v1515
    %1896 = vmatpush1.bf16.msra.mxu0 %v1514
    %1897 = vmatprep.subr.bf16.mxu0 %v1507
    %1898 = vmatpush1.bf16.msra.mxu0 %v1506
    %1899 = vmatprep.subr.bf16.mxu0 %v1499
    %1900 = vmatpush1.bf16.msra.mxu0 %v1498
    %1901 = vmatprep.subr.bf16.mxu0 %v1491
    %1902 = vmatpush1.bf16.msra.mxu0 %v1490
    %1903 = vmatprep.subr.bf16.mxu0 %v1483
    %1904 = vmatpush1.bf16.msra.mxu0 %v1482
    %1905 = vmatprep.subr.bf16.mxu0 %v1475
    %1906 = vmatpush1.bf16.msra.mxu0 %v1474
    %1907 = vmatprep.subr.bf16.mxu0 %v1467
    %1908 = vmatpush1.bf16.msra.mxu0 %v1466
    %1909 = vmatprep.subr.bf16.mxu0 %v1587
    %1910 = vmatpush2.bf16.msra.mxu0 %v1586
    %1911 = vmatprep.subr.bf16.mxu0 %v1579
    %1912 = vmatpush2.bf16.msra.mxu0 %v1578
    %1913 = vmatprep.subr.bf16.mxu0 %v1571
    %1914 = vmatpush2.bf16.msra.mxu0 %v1570
    %1915 = vmatprep.subr.bf16.mxu0 %v1563
    %1916 = vmatpush2.bf16.msra.mxu0 %v1562
    %1917 = vmatprep.subr.bf16.mxu0 %v1555
    %1918 = vmatpush2.bf16.msra.mxu0 %v1554
    %1919 = vmatprep.subr.bf16.mxu0 %v1547
    %1920 = vmatpush2.bf16.msra.mxu0 %v1546
    %1921 = vmatprep.subr.bf16.mxu0 %v1539
    %1922 = vmatpush2.bf16.msra.mxu0 %v1538
    %1923 = vmatprep.subr.bf16.mxu0 %v1531
    %1924 = vmatpush2.bf16.msra.mxu0 %v1530
    %1925 = vmatprep.mubr.bf16.mxu0 %v272
    %1926 = vmatmul.mubr.bf16.gmra.mxu0 %v271
    %v1927 = vpop.f32.mrf.mxu0
    %v1928 = vadd.f32 %v1885, %v1927
    %v1929 = vpop.f32.mrf.mxu0
    %v1930 = vadd.f32 %v1887, %v1929
    %v1931 = vpop.f32.mrf.mxu0
    %v1932 = vadd.f32 %v1889, %v1931
    %v1933 = vpop.f32.mrf.mxu0
    %v1934 = vadd.f32 %v1891, %v1933
    %1935 = vdwg.mxu0
    %1936 = vmatprep.subr.bf16.mxu0 %v1397
    %1937 = vmatpush1.bf16.msra.mxu0 %v1396
    %1938 = vmatprep.subr.bf16.mxu0 %v1389
    %1939 = vmatpush1.bf16.msra.mxu0 %v1388
    %1940 = vmatprep.subr.bf16.mxu0 %v1381
    %1941 = vmatpush1.bf16.msra.mxu0 %v1380
    %1942 = vmatprep.subr.bf16.mxu0 %v1373
    %1943 = vmatpush1.bf16.msra.mxu0 %v1372
    %1944 = vmatprep.subr.bf16.mxu0 %v1365
    %1945 = vmatpush1.bf16.msra.mxu0 %v1364
    %1946 = vmatprep.subr.bf16.mxu0 %v1357
    %1947 = vmatpush1.bf16.msra.mxu0 %v1356
    %1948 = vmatprep.subr.bf16.mxu0 %v1349
    %1949 = vmatpush1.bf16.msra.mxu0 %v1348
    %1950 = vmatprep.subr.bf16.mxu0 %v1341
    %1951 = vmatpush1.bf16.msra.mxu0 %v1340
    %1952 = vmatprep.subr.bf16.mxu0 %v1461
    %1953 = vmatpush2.bf16.msra.mxu0 %v1460
    %1954 = vmatprep.subr.bf16.mxu0 %v1453
    %1955 = vmatpush2.bf16.msra.mxu0 %v1452
    %1956 = vmatprep.subr.bf16.mxu0 %v1445
    %1957 = vmatpush2.bf16.msra.mxu0 %v1444
    %1958 = vmatprep.subr.bf16.mxu0 %v1437
    %1959 = vmatpush2.bf16.msra.mxu0 %v1436
    %1960 = vmatprep.subr.bf16.mxu0 %v1429
    %1961 = vmatpush2.bf16.msra.mxu0 %v1428
    %1962 = vmatprep.subr.bf16.mxu0 %v1421
    %1963 = vmatpush2.bf16.msra.mxu0 %v1420
    %1964 = vmatprep.subr.bf16.mxu0 %v1413
    %1965 = vmatpush2.bf16.msra.mxu0 %v1412
    %1966 = vmatprep.subr.bf16.mxu0 %v1405
    %1967 = vmatpush2.bf16.msra.mxu0 %v1404
    %1968 = vmatprep.mubr.bf16.mxu0 %v270
    %1969 = vmatmul.mubr.bf16.gmra.mxu0 %v269
    %v1970 = vpop.f32.mrf.mxu0
    %v1971 = vadd.f32 %v541, %v1970
    %v1972 = vpop.f32.mrf.mxu0
    %v1973 = vadd.f32 %v545, %v1972
    %v1974 = vpop.f32.mrf.mxu0
    %v1975 = vadd.f32 %v541, %v1974
    %v1976 = vpop.f32.mrf.mxu0
    %v1977 = vadd.f32 %v545, %v1976
    %1978 = vdwg.mxu0
    %1979 = vmatprep.subr.bf16.mxu0 %v1525
    %1980 = vmatpush1.bf16.msra.mxu0 %v1524
    %1981 = vmatprep.subr.bf16.mxu0 %v1517
    %1982 = vmatpush1.bf16.msra.mxu0 %v1516
    %1983 = vmatprep.subr.bf16.mxu0 %v1509
    %1984 = vmatpush1.bf16.msra.mxu0 %v1508
    %1985 = vmatprep.subr.bf16.mxu0 %v1501
    %1986 = vmatpush1.bf16.msra.mxu0 %v1500
    %1987 = vmatprep.subr.bf16.mxu0 %v1493
    %1988 = vmatpush1.bf16.msra.mxu0 %v1492
    %1989 = vmatprep.subr.bf16.mxu0 %v1485
    %1990 = vmatpush1.bf16.msra.mxu0 %v1484
    %1991 = vmatprep.subr.bf16.mxu0 %v1477
    %1992 = vmatpush1.bf16.msra.mxu0 %v1476
    %1993 = vmatprep.subr.bf16.mxu0 %v1469
    %1994 = vmatpush1.bf16.msra.mxu0 %v1468
    %1995 = vmatprep.subr.bf16.mxu0 %v1589
    %1996 = vmatpush2.bf16.msra.mxu0 %v1588
    %1997 = vmatprep.subr.bf16.mxu0 %v1581
    %1998 = vmatpush2.bf16.msra.mxu0 %v1580
    %1999 = vmatprep.subr.bf16.mxu0 %v1573
    %2000 = vmatpush2.bf16.msra.mxu0 %v1572
    %2001 = vmatprep.subr.bf16.mxu0 %v1565
    %2002 = vmatpush2.bf16.msra.mxu0 %v1564
    %2003 = vmatprep.subr.bf16.mxu0 %v1557
    %2004 = vmatpush2.bf16.msra.mxu0 %v1556
    %2005 = vmatprep.subr.bf16.mxu0 %v1549
    %2006 = vmatpush2.bf16.msra.mxu0 %v1548
    %2007 = vmatprep.subr.bf16.mxu0 %v1541
    %2008 = vmatpush2.bf16.msra.mxu0 %v1540
    %2009 = vmatprep.subr.bf16.mxu0 %v1533
    %2010 = vmatpush2.bf16.msra.mxu0 %v1532
    %2011 = vmatprep.mubr.bf16.mxu0 %v272
    %2012 = vmatmul.mubr.bf16.gmra.mxu0 %v271
    %v2013 = vpop.f32.mrf.mxu0
    %v2014 = vadd.f32 %v1971, %v2013
    %v2015 = vpop.f32.mrf.mxu0
    %v2016 = vadd.f32 %v1973, %v2015
    %v2017 = vpop.f32.mrf.mxu0
    %v2018 = vadd.f32 %v1975, %v2017
    %v2019 = vpop.f32.mrf.mxu0
    %v2020 = vadd.f32 %v1977, %v2019
    %2021 = vdwg.mxu0
    %2022 = vmatprep.subr.bf16.mxu0 %v1399
    %2023 = vmatpush1.bf16.msra.mxu0 %v1398
    %2024 = vmatprep.subr.bf16.mxu0 %v1391
    %2025 = vmatpush1.bf16.msra.mxu0 %v1390
    %2026 = vmatprep.subr.bf16.mxu0 %v1383
    %2027 = vmatpush1.bf16.msra.mxu0 %v1382
    %2028 = vmatprep.subr.bf16.mxu0 %v1375
    %2029 = vmatpush1.bf16.msra.mxu0 %v1374
    %2030 = vmatprep.subr.bf16.mxu0 %v1367
    %2031 = vmatpush1.bf16.msra.mxu0 %v1366
    %2032 = vmatprep.subr.bf16.mxu0 %v1359
    %2033 = vmatpush1.bf16.msra.mxu0 %v1358
    %2034 = vmatprep.subr.bf16.mxu0 %v1351
    %2035 = vmatpush1.bf16.msra.mxu0 %v1350
    %2036 = vmatprep.subr.bf16.mxu0 %v1343
    %2037 = vmatpush1.bf16.msra.mxu0 %v1342
    %2038 = vmatprep.subr.bf16.mxu0 %v1463
    %2039 = vmatpush2.bf16.msra.mxu0 %v1462
    %2040 = vmatprep.subr.bf16.mxu0 %v1455
    %2041 = vmatpush2.bf16.msra.mxu0 %v1454
    %2042 = vmatprep.subr.bf16.mxu0 %v1447
    %2043 = vmatpush2.bf16.msra.mxu0 %v1446
    %2044 = vmatprep.subr.bf16.mxu0 %v1439
    %2045 = vmatpush2.bf16.msra.mxu0 %v1438
    %2046 = vmatprep.subr.bf16.mxu0 %v1431
    %2047 = vmatpush2.bf16.msra.mxu0 %v1430
    %2048 = vmatprep.subr.bf16.mxu0 %v1423
    %2049 = vmatpush2.bf16.msra.mxu0 %v1422
    %2050 = vmatprep.subr.bf16.mxu0 %v1415
    %2051 = vmatpush2.bf16.msra.mxu0 %v1414
    %2052 = vmatprep.subr.bf16.mxu0 %v1407
    %2053 = vmatpush2.bf16.msra.mxu0 %v1406
    %2054 = vmatprep.mubr.bf16.mxu0 %v270
    %2055 = vmatmul.mubr.bf16.gmra.mxu0 %v269
    %v2056 = vpop.f32.mrf.mxu0
    %v2057 = vadd.f32 %v549, %v2056
    %v2058 = vpop.f32.mrf.mxu0
    %v2059 = vadd.f32 %v553, %v2058
    %v2060 = vpop.f32.mrf.mxu0
    %v2061 = vadd.f32 %v549, %v2060
    %v2062 = vpop.f32.mrf.mxu0
    %v2063 = vadd.f32 %v553, %v2062
    %2064 = vdwg.mxu0
    %2065 = vmatprep.subr.bf16.mxu0 %v1527
    %2066 = vmatpush1.bf16.msra.mxu0 %v1526
    %2067 = vmatprep.subr.bf16.mxu0 %v1519
    %2068 = vmatpush1.bf16.msra.mxu0 %v1518
    %2069 = vmatprep.subr.bf16.mxu0 %v1511
    %2070 = vmatpush1.bf16.msra.mxu0 %v1510
    %2071 = vmatprep.subr.bf16.mxu0 %v1503
    %2072 = vmatpush1.bf16.msra.mxu0 %v1502
    %2073 = vmatprep.subr.bf16.mxu0 %v1495
    %2074 = vmatpush1.bf16.msra.mxu0 %v1494
    %2075 = vmatprep.subr.bf16.mxu0 %v1487
    %2076 = vmatpush1.bf16.msra.mxu0 %v1486
    %2077 = vmatprep.subr.bf16.mxu0 %v1479
    %2078 = vmatpush1.bf16.msra.mxu0 %v1478
    %2079 = vmatprep.subr.bf16.mxu0 %v1471
    %2080 = vmatpush1.bf16.msra.mxu0 %v1470
    %2081 = vmatprep.subr.bf16.mxu0 %v1591
    %2082 = vmatpush2.bf16.msra.mxu0 %v1590
    %2083 = vmatprep.subr.bf16.mxu0 %v1583
    %2084 = vmatpush2.bf16.msra.mxu0 %v1582
    %2085 = vmatprep.subr.bf16.mxu0 %v1575
    %2086 = vmatpush2.bf16.msra.mxu0 %v1574
    %2087 = vmatprep.subr.bf16.mxu0 %v1567
    %2088 = vmatpush2.bf16.msra.mxu0 %v1566
    %2089 = vmatprep.subr.bf16.mxu0 %v1559
    %2090 = vmatpush2.bf16.msra.mxu0 %v1558
    %2091 = vmatprep.subr.bf16.mxu0 %v1551
    %2092 = vmatpush2.bf16.msra.mxu0 %v1550
    %2093 = vmatprep.subr.bf16.mxu0 %v1543
    %2094 = vmatpush2.bf16.msra.mxu0 %v1542
    %2095 = vmatprep.subr.bf16.mxu0 %v1535
    %2096 = vmatpush2.bf16.msra.mxu0 %v1534
    %2097 = vmatprep.mubr.bf16.mxu0 %v272
    %2098 = vmatmul.mubr.bf16.gmra.mxu0 %v271
    %v2099 = vpop.f32.mrf.mxu0
    %v2100 = vadd.f32 %v2057, %v2099
    %v2101 = vpop.f32.mrf.mxu0
    %v2102 = vadd.f32 %v2059, %v2101
    %v2103 = vpop.f32.mrf.mxu0
    %v2104 = vadd.f32 %v2061, %v2103
    %v2105 = vpop.f32.mrf.mxu0
    %v2106 = vadd.f32 %v2063, %v2105
    %2107 = vdwg.mxu0
    %2108 = vmatprep.subr.bf16.mxu0 %v1401
    %2109 = vmatpush1.bf16.msra.mxu0 %v1400
    %2110 = vmatprep.subr.bf16.mxu0 %v1393
    %2111 = vmatpush1.bf16.msra.mxu0 %v1392
    %2112 = vmatprep.subr.bf16.mxu0 %v1385
    %2113 = vmatpush1.bf16.msra.mxu0 %v1384
    %2114 = vmatprep.subr.bf16.mxu0 %v1377
    %2115 = vmatpush1.bf16.msra.mxu0 %v1376
    %2116 = vmatprep.subr.bf16.mxu0 %v1369
    %2117 = vmatpush1.bf16.msra.mxu0 %v1368
    %2118 = vmatprep.subr.bf16.mxu0 %v1361
    %2119 = vmatpush1.bf16.msra.mxu0 %v1360
    %2120 = vmatprep.subr.bf16.mxu0 %v1353
    %2121 = vmatpush1.bf16.msra.mxu0 %v1352
    %2122 = vmatprep.subr.bf16.mxu0 %v1345
    %2123 = vmatpush1.bf16.msra.mxu0 %v1344
    %2124 = vmatprep.subr.bf16.mxu0 %v1465
    %2125 = vmatpush2.bf16.msra.mxu0 %v1464
    %2126 = vmatprep.subr.bf16.mxu0 %v1457
    %2127 = vmatpush2.bf16.msra.mxu0 %v1456
    %2128 = vmatprep.subr.bf16.mxu0 %v1449
    %2129 = vmatpush2.bf16.msra.mxu0 %v1448
    %2130 = vmatprep.subr.bf16.mxu0 %v1441
    %2131 = vmatpush2.bf16.msra.mxu0 %v1440
    %2132 = vmatprep.subr.bf16.mxu0 %v1433
    %2133 = vmatpush2.bf16.msra.mxu0 %v1432
    %2134 = vmatprep.subr.bf16.mxu0 %v1425
    %2135 = vmatpush2.bf16.msra.mxu0 %v1424
    %2136 = vmatprep.subr.bf16.mxu0 %v1417
    %2137 = vmatpush2.bf16.msra.mxu0 %v1416
    %2138 = vmatprep.subr.bf16.mxu0 %v1409
    %2139 = vmatpush2.bf16.msra.mxu0 %v1408
    %2140 = vmatprep.mubr.bf16.mxu0 %v270
    %2141 = vmatmul.mubr.bf16.gmra.mxu0 %v269
    %v2142 = vpop.f32.mrf.mxu0
    %v2143 = vadd.f32 %v557, %v2142
    %v2144 = vpop.f32.mrf.mxu0
    %v2145 = vadd.f32 %v561, %v2144
    %v2146 = vpop.f32.mrf.mxu0
    %v2147 = vadd.f32 %v557, %v2146
    %v2148 = vpop.f32.mrf.mxu0
    %v2149 = vadd.f32 %v561, %v2148
    %2150 = vdwg.mxu0
    %2151 = vmatprep.subr.bf16.mxu0 %v1529
    %2152 = vmatpush1.bf16.msra.mxu0 %v1528
    %2153 = vmatprep.subr.bf16.mxu0 %v1521
    %2154 = vmatpush1.bf16.msra.mxu0 %v1520
    %2155 = vmatprep.subr.bf16.mxu0 %v1513
    %2156 = vmatpush1.bf16.msra.mxu0 %v1512
    %2157 = vmatprep.subr.bf16.mxu0 %v1505
    %2158 = vmatpush1.bf16.msra.mxu0 %v1504
    %2159 = vmatprep.subr.bf16.mxu0 %v1497
    %2160 = vmatpush1.bf16.msra.mxu0 %v1496
    %2161 = vmatprep.subr.bf16.mxu0 %v1489
    %2162 = vmatpush1.bf16.msra.mxu0 %v1488
    %2163 = vmatprep.subr.bf16.mxu0 %v1481
    %2164 = vmatpush1.bf16.msra.mxu0 %v1480
    %2165 = vmatprep.subr.bf16.mxu0 %v1473
    %2166 = vmatpush1.bf16.msra.mxu0 %v1472
    %2167 = vmatprep.subr.bf16.mxu0 %v1593
    %2168 = vmatpush2.bf16.msra.mxu0 %v1592
    %2169 = vmatprep.subr.bf16.mxu0 %v1585
    %2170 = vmatpush2.bf16.msra.mxu0 %v1584
    %2171 = vmatprep.subr.bf16.mxu0 %v1577
    %2172 = vmatpush2.bf16.msra.mxu0 %v1576
    %2173 = vmatprep.subr.bf16.mxu0 %v1569
    %2174 = vmatpush2.bf16.msra.mxu0 %v1568
    %2175 = vmatprep.subr.bf16.mxu0 %v1561
    %2176 = vmatpush2.bf16.msra.mxu0 %v1560
    %2177 = vmatprep.subr.bf16.mxu0 %v1553
    %2178 = vmatpush2.bf16.msra.mxu0 %v1552
    %2179 = vmatprep.subr.bf16.mxu0 %v1545
    %2180 = vmatpush2.bf16.msra.mxu0 %v1544
    %2181 = vmatprep.subr.bf16.mxu0 %v1537
    %2182 = vmatpush2.bf16.msra.mxu0 %v1536
    %2183 = vmatprep.mubr.bf16.mxu0 %v272
    %2184 = vmatmul.mubr.bf16.gmra.mxu0 %v271
    %v2185 = vpop.f32.mrf.mxu0
    %v2186 = vadd.f32 %v2143, %v2185
    %v2187 = vpop.f32.mrf.mxu0
    %v2188 = vadd.f32 %v2145, %v2187
    %v2189 = vpop.f32.mrf.mxu0
    %v2190 = vadd.f32 %v2147, %v2189
    %v2191 = vpop.f32.mrf.mxu0
    %v2192 = vadd.f32 %v2149, %v2191
    %2193 = vdwg.mxu0
    %v2194 = vmax.f32 %v1928, 0.0
    %v2195 = vmax.f32 %v1930, 0.0
    %v2196 = vmax.f32 %v2014, 0.0
    %v2197 = vmax.f32 %v2016, 0.0
    %v2198 = vmax.f32 %v2100, 0.0
    %v2199 = vmax.f32 %v2102, 0.0
    %v2200 = vmax.f32 %v2186, 0.0
    %v2201 = vmax.f32 %v2188, 0.0
    %v2202 = vmax.f32 %v1932, 0.0
    %v2203 = vmax.f32 %v1934, 0.0
    %v2204 = vmax.f32 %v2018, 0.0
    %v2205 = vmax.f32 %v2020, 0.0
    %v2206 = vmax.f32 %v2104, 0.0
    %v2207 = vmax.f32 %v2106, 0.0
    %v2208 = vmax.f32 %v2190, 0.0
    %v2209 = vmax.f32 %v2192, 0.0
    %v2210 = vld [vmem:[#allocation10] sm:$0xff]
    %v2212 = vlaneseq
    %v2213 = vshrl.u32 %v2212, 7
    %v2214 = vsub.s32 0, %v2213
    %v2215 = vrot.slane %v2210, %v2214
    %v2216 = vlaneseq
    %v2217 = vshrl.u32 %v2216, 7
    %v2218 = vsub.s32 1, %v2217
    %v2219 = vrot.slane %v2210, %v2218
    %v2220 = vlaneseq
    %v2221 = vshrl.u32 %v2220, 7
    %v2222 = vsub.s32 2, %v2221
    %v2223 = vrot.slane %v2210, %v2222
    %v2224 = vlaneseq
    %v2225 = vshrl.u32 %v2224, 7
    %v2226 = vsub.s32 3, %v2225
    %v2227 = vrot.slane %v2210, %v2226
    %v2228 = vlaneseq
    %v2229 = vshrl.u32 %v2228, 7
    %v2230 = vsub.s32 4, %v2229
    %v2231 = vrot.slane %v2210, %v2230
    %v2232 = vlaneseq
    %v2233 = vshrl.u32 %v2232, 7
    %v2234 = vsub.s32 5, %v2233
    %v2235 = vrot.slane %v2210, %v2234
    %v2236 = vlaneseq
    %v2237 = vshrl.u32 %v2236, 7
    %v2238 = vsub.s32 6, %v2237
    %v2239 = vrot.slane %v2210, %v2238
    %v2240 = vlaneseq
    %v2241 = vshrl.u32 %v2240, 7
    %v2242 = vsub.s32 7, %v2241
    %v2243 = vrot.slane %v2210, %v2242
    %v2252 = vmul.f32 %v2194, %v2215
    %v2253 = vmul.f32 %v2195, %v2219
    %v2254 = vmul.f32 %v2196, %v2223
    %v2255 = vmul.f32 %v2197, %v2227
    %v2256 = vmul.f32 %v2198, %v2231
    %v2257 = vmul.f32 %v2199, %v2235
    %v2258 = vmul.f32 %v2200, %v2239
    %v2259 = vmul.f32 %v2201, %v2243
    %v2260 = vmul.f32 %v2202, %v2215
    %v2261 = vmul.f32 %v2203, %v2219
    %v2262 = vmul.f32 %v2204, %v2223
    %v2263 = vmul.f32 %v2205, %v2227
    %v2264 = vmul.f32 %v2206, %v2231
    %v2265 = vmul.f32 %v2207, %v2235
    %v2266 = vmul.f32 %v2208, %v2239
    %v2267 = vmul.f32 %v2209, %v2243
    %v2268 = vadd.f32 %v2252, %v2253
    %v2269 = vadd.f32 %v2268, %v2254
    %v2270 = vadd.f32 %v2269, %v2255
    %v2271 = vadd.f32 %v2270, %v2256
    %v2272 = vadd.f32 %v2271, %v2257
    %v2273 = vadd.f32 %v2272, %v2258
    %v2274 = vadd.f32 %v2273, %v2259
    %2275 = vadd.xlane.f32.xlu0 %v2274
    %v2276 = vpop.xlane.xlu0 %2275
    %v2277 = vadd.f32 %v2260, %v2261
    %v2278 = vadd.f32 %v2277, %v2262
    %v2279 = vadd.f32 %v2278, %v2263
    %v2280 = vadd.f32 %v2279, %v2264
    %v2281 = vadd.f32 %v2280, %v2265
    %v2282 = vadd.f32 %v2281, %v2266
    %v2283 = vadd.f32 %v2282, %v2267
    %2284 = vadd.xlane.f32.xlu0 %v2283
    %v2285 = vpop.xlane.xlu0 %2284
    %v2286 = vld [vmem:[#allocation2] sm:$0x1]
    %v2288 = vlaneseq
    %v2289 = vshrl.u32 %v2288, 7
    %v2290 = vsub.s32 0, %v2289
    %v2291 = vrot.slane %v2286, %v2290
    %v2293 = vadd.f32 %v2276, %v2291
    %v2294 = vadd.f32 %v2285, %v2291
    %vm2295 = vcmask 7168
    %2296 = vst.msk [vmem:[%s7] sm:$0xff] %vm2295, %v2293
    %2297 = vst.msk [vmem:[%s7 + $0x8] sm:$0xff] %vm2295, %v2294
    // Predicated region
    $region50: #{tpu_custom_call.1} parent=1 // pred_check
      _
    $region51: #{tpu_custom_call.1} parent=1 // pred_check_branch
      %2299 = sbr.rel (0) target = $region53
    $region52: #{tpu_custom_call.1} parent=1 // pred_region
      _
    $region53: #{tpu_custom_call.1} parent=1 // pred_fallthru
      _
    // Predicated region
    $region54: #{tpu_custom_call.1} parent=1 // pred_check
      _
    $region55: #{tpu_custom_call.1} parent=1 // pred_check_branch
      %2301 = sbr.rel (0) target = $region57
    $region56: #{tpu_custom_call.1} parent=1 // pred_region
      _
    $region57: #{tpu_custom_call.1} parent=1 // pred_fallthru
      _
    %2302 = vsyncpa [#allocation4], 1
    %2303 = vsyncpa [#allocation6], 1
    %2304 = vsyncpa [#allocation9], 1

</llo_original>
